<compile_context>
chip_gen: v7x
topology: tpu7x:2x2x1
jax: 0.10.0
libtpu: 0.0.40
codegen_flags: <defaults>
</compile_context>

<pallas_src>
import functools

import jax
import jax.numpy as jnp
from jax import lax
from jax.experimental import pallas as pl
from jax.experimental.pallas import tpu as pltpu


_VMEM_LIMIT = 32 * 1024 * 1024          # explicit scoped-VMEM limit (>= v5e default)
_MM_PRECISION = jax.lax.Precision.DEFAULT  # single bf16 MXU pass, f32 accumulation


def _mm(a, b):
    return jnp.dot(a, b, preferred_element_type=jnp.float32,
                   precision=_MM_PRECISION)


def _full(a):
    """Whole-array block (block dims == array dims) for a rank-1 grid."""
    nd = a.ndim
    return pl.BlockSpec(a.shape, lambda i, _nd=nd: (0,) * _nd)


def _mosaic_params(*sem):
    return pltpu.CompilerParams(dimension_semantics=sem,
                                vmem_limit_bytes=_VMEM_LIMIT)


# ---------------------------------------------------------------------------
# Kernel 1: pairwise squared distances (row tile vs. all nodes), computed
# directly on the VPU (exact in f32), diagonal masked so knn has no self loops.
# ---------------------------------------------------------------------------
def _dist_kernel(xq_ref, xat_ref, d_ref):
    tn = xq_ref.shape[0]
    f, n = xat_ref.shape
    xq = xq_ref[...]                                   # (tn, F)
    xat = xat_ref[...]                                 # (F, N)
    acc = jnp.zeros((tn, n), jnp.float32)
    for c in range(f):                                 # F is tiny (static unroll)
        diff = xq[:, c:c + 1] - xat[c:c + 1, :]        # (tn, 1) - (1, N) -> (tn, N)
        acc = acc + diff * diff
    rid = pl.program_id(0) * tn + lax.broadcasted_iota(jnp.int32, (tn, n), 0)
    cid = lax.broadcasted_iota(jnp.int32, (tn, n), 1)
    d_ref[...] = jnp.where(rid == cid, jnp.float32(1e30), acc)


def knn_indices(x, k, tn=None):
    n, f = x.shape
    if tn is None:
        tn = 128 if n % 128 == 0 else n
    assert n % tn == 0 and tn % 8 == 0, "node count must tile into (8, .) rows"
    xt = x.T                                           # (F, N), tiny XLA transpose
    d = pl.pallas_call(
        _dist_kernel,
        grid=(n // tn,),
        in_specs=[pl.BlockSpec((tn, f), lambda i: (i, 0)),
                  pl.BlockSpec((f, n), lambda i: (0, 0))],
        out_specs=pl.BlockSpec((tn, n), lambda i: (i, 0)),
        out_shape=jax.ShapeDtypeStruct((n, n), jnp.float32),
        compiler_params=_mosaic_params("parallel"),
    )(x, xt)
    # TODO(synk): lax.top_k lowers to an XLA sort; no Pallas top-k primitive.
    return lax.top_k(-d, k)[1]                         # (N, k) source indices


# ---------------------------------------------------------------------------
# Kernel 2: DynamicEdgeConv(node_encoder, aggr='add') + outer ReLU.
#   msg_ij = MLP([x_i, x_j - x_i]) ; h_i = relu(sum_j msg_ij)
# Weight fusion: x_i @ W1a + (x_j - x_i) @ W1b = x_i @ (W1a - W1b) + x_j @ W1b.
# The second (linear) layer is applied after the k-aggregation.
# ---------------------------------------------------------------------------
def _node_enc_kernel(x_ref, xs_ref, wc_ref, ws_ref, b1_ref, w2_ref, b2k_ref, h_ref):
    k, tn, f = xs_ref.shape
    pc = _mm(x_ref[...], wc_ref[...]) + b1_ref[...]           # (tn, H) center proj
    ps = _mm(xs_ref[...].reshape(k * tn, f), ws_ref[...])     # (k*tn, H) source proj
    hid = jnp.maximum(ps.reshape(k, tn, -1) + pc[None], 0.0)  # (k, tn, H)
    s = jnp.sum(hid, axis=0)                                  # k-1 VPU adds -> (tn, H)
    h_ref[...] = jnp.maximum(_mm(s, w2_ref[...]) + b2k_ref[...], 0.0)


def _node_encoder(x, xs, wc, ws, b1, w2, b2k, *, tn):
    n, f = x.shape
    k = xs.shape[0]
    hd = w2.shape[1]
    return pl.pallas_call(
        _node_enc_kernel,
        grid=(n // tn,),
        in_specs=[pl.BlockSpec((tn, f), lambda i: (i, 0)),
                  pl.BlockSpec((k, tn, f), lambda i: (0, i, 0)),
                  _full(wc), _full(ws), _full(b1), _full(w2), _full(b2k)],
        out_specs=pl.BlockSpec((tn, hd), lambda i: (i, 0)),
        out_shape=jax.ShapeDtypeStruct((n, hd), jnp.float32),
        compiler_params=_mosaic_params("parallel"),
    )(x, xs, wc, ws, b1, w2, b2k)


# ---------------------------------------------------------------------------
# Kernel 3: edge encoder + first interaction layer (shares the h[src] gather).
#   e0 = relu(MLP_e([h_src, h_dst]))
#   e1 = phi_R([h_dst, h_src, e0]);  dh = phi_O([h, sum_j e1]);  h' = a*h+(1-a)*dh
# Fused weights: wh = [A1d | R1i | O1x] (LHS h), whs = [A1s | R1j] (LHS h_src).
# ---------------------------------------------------------------------------
def _edge_layer0_kernel(h_ref, hs_ref, wh_ref, bh_ref, whs_ref, a2_ref, ab2_ref,
                        r1e_ref, r2_ref, rb2_ref, o1a_ref, o2_ref, ob2_ref,
                        hout_ref, eout_ref, *, alpha):
    k, tn, hd = hs_ref.shape
    hh = a2_ref.shape[0]
    h = h_ref[...]                                            # (tn, hd)
    ctr = _mm(h, wh_ref[...]) + bh_ref[...]                   # (tn, 3*hh)
    cd, cr, cox = ctr[:, :hh], ctr[:, hh:2 * hh], ctr[:, 2 * hh:]
    hsp = _mm(hs_ref[...].reshape(k * tn, hd), whs_ref[...])  # (k*tn, 2*hh)
    hs_a, hs_r = hsp[:, :hh], hsp[:, hh:]
    # edge encoder
    eh = jnp.maximum(hs_a.reshape(k, tn, hh) + cd[None], 0.0)
    e0 = jnp.maximum(_mm(eh.reshape(k * tn, hh), a2_ref[...]) + ab2_ref[...], 0.0)
    # relational model
    rh = jnp.maximum((hs_r + _mm(e0, r1e_ref[...])).reshape(k, tn, hh) + cr[None], 0.0)
    e1 = _mm(rh.reshape(k * tn, hh), r2_ref[...]) + rb2_ref[...]
    e1 = e1.reshape(k, tn, -1)
    aggr = jnp.sum(e1, axis=0)                                # (tn, e_dim)
    # object model + residual mix
    oh = jnp.maximum(cox + _mm(aggr, o1a_ref[...]), 0.0)
    dh = _mm(oh, o2_ref[...]) + ob2_ref[...]
    hout_ref[...] = alpha * h + (1.0 - alpha) * dh
    eout_ref[...] = e1


def _edge_enc_plus_layer(h, hs, wh, bh, whs, a2, ab2, r1e, r2, rb2, o1a, o2, ob2,
                         *, alpha, tn):
    n, hd = h.shape
    k = hs.shape[0]
    ed = r2.shape[1]
    kern = functools.partial(_edge_layer0_kernel, alpha=alpha)
    return pl.pallas_call(
        kern,
        grid=(n // tn,),
        in_specs=[pl.BlockSpec((tn, hd), lambda i: (i, 0)),
                  pl.BlockSpec((k, tn, hd), lambda i: (0, i, 0)),
                  _full(wh), _full(bh), _full(whs), _full(a2), _full(ab2),
                  _full(r1e), _full(r2), _full(rb2), _full(o1a), _full(o2),
                  _full(ob2)],
        out_specs=(pl.BlockSpec((tn, hd), lambda i: (i, 0)),
                   pl.BlockSpec((k, tn, ed), lambda i: (0, i, 0))),
        out_shape=(jax.ShapeDtypeStruct((n, hd), jnp.float32),
                   jax.ShapeDtypeStruct((k, n, ed), jnp.float32)),
        compiler_params=_mosaic_params("parallel"),
    )(h, hs, wh, bh, whs, a2, ab2, r1e, r2, rb2, o1a, o2, ob2)


# ---------------------------------------------------------------------------
# Kernel 4: interaction layer l >= 1 (edge_attr from the previous layer).
# Fused weights: wh = [R1i | O1x] (LHS h).
# ---------------------------------------------------------------------------
def _in_layer_kernel(h_ref, hs_ref, e_ref, wh_ref, bh_ref, r1j_ref, r1e_ref,
                     r2_ref, rb2_ref, o1a_ref, o2_ref, ob2_ref,
                     hout_ref, eout_ref, *, alpha):
    k, tn, hd = hs_ref.shape
    ed = e_ref.shape[2]
    hh = r2_ref.shape[0]
    h = h_ref[...]
    ctr = _mm(h, wh_ref[...]) + bh_ref[...]                   # (tn, 2*hh)
    cr, cox = ctr[:, :hh], ctr[:, hh:]
    pe = (_mm(hs_ref[...].reshape(k * tn, hd), r1j_ref[...])
          + _mm(e_ref[...].reshape(k * tn, ed), r1e_ref[...]))
    rh = jnp.maximum(pe.reshape(k, tn, hh) + cr[None], 0.0)
    e1 = _mm(rh.reshape(k * tn, hh), r2_ref[...]) + rb2_ref[...]
    e1 = e1.reshape(k, tn, -1)
    aggr = jnp.sum(e1, axis=0)
    oh = jnp.maximum(cox + _mm(aggr, o1a_ref[...]), 0.0)
    dh = _mm(oh, o2_ref[...]) + ob2_ref[...]
    hout_ref[...] = alpha * h + (1.0 - alpha) * dh
    eout_ref[...] = e1


def _in_layer(h, hs, e, wh, bh, r1j, r1e, r2, rb2, o1a, o2, ob2, *, alpha, tn):
    n, hd = h.shape
    k = hs.shape[0]
    ed = e.shape[2]
    kern = functools.partial(_in_layer_kernel, alpha=alpha)
    return pl.pallas_call(
        kern,
        grid=(n // tn,),
        in_specs=[pl.BlockSpec((tn, hd), lambda i: (i, 0)),
                  pl.BlockSpec((k, tn, hd), lambda i: (0, i, 0)),
                  pl.BlockSpec((k, tn, ed), lambda i: (0, i, 0)),
                  _full(wh), _full(bh), _full(r1j), _full(r1e), _full(r2),
                  _full(rb2), _full(o1a), _full(o2), _full(ob2)],
        out_specs=(pl.BlockSpec((tn, hd), lambda i: (i, 0)),
                   pl.BlockSpec((k, tn, ed), lambda i: (0, i, 0))),
        out_shape=(jax.ShapeDtypeStruct((n, hd), jnp.float32),
                   jax.ShapeDtypeStruct((k, n, ed), jnp.float32)),
        compiler_params=_mosaic_params("parallel"),
    )(h, hs, e, wh, bh, r1j, r1e, r2, rb2, o1a, o2, ob2)


# ---------------------------------------------------------------------------
# Full INConvBlock forward.
# ---------------------------------------------------------------------------
def inconv_block_forward(x, nbr, params, *, alpha=0.5, tn=128):
    alpha = float(alpha)
    n, indim = x.shape
    k = nbr.shape[1]
    if n % tn != 0:
        tn = n
    assert n % tn == 0 and tn % 8 == 0, "node count must tile into (8, .) rows"

    ne = params["node_enc"]
    hd = ne["w2"].shape[1]

    # j-major flat source indices: row j*N + i holds neighbour j of node i.
    src = nbr.T.reshape(-1)

    # DynamicEdgeConv(node_encoder, aggr='add') + outer ReLU.
    # Raw x rows are gathered in XLA (O(E*indim) only); projections are in-kernel.
    xs = jnp.take(x, src, axis=0).reshape(k, n, indim)
    wc = ne["w1"][:indim] - ne["w1"][indim:]        # x_i picks up (W1a - W1b)
    ws = ne["w1"][indim:]                           # x_j picks up W1b
    h = _node_encoder(x, xs, wc, ws, ne["b1"], ne["w2"],
                      float(k) * ne["b2"], tn=tn)

    if not params["layers"]:
        return h

    ee = params["edge_enc"]
    e = None
    for l, layer in enumerate(params["layers"]):
        rel, obj = layer["rel"], layer["obj"]
        hs = jnp.take(h, src, axis=0).reshape(k, n, hd)   # XLA row gather of h
        if l == 0:
            # Fuse all same-LHS projections of edge encoder + first IN layer.
            wh = jnp.concatenate([ee["w1"][hd:], rel["w1"][:hd], obj["w1"][:hd]], axis=1)
            bh = jnp.concatenate([ee["b1"], rel["b1"], obj["b1"]], axis=1)
            whs = jnp.concatenate([ee["w1"][:hd], rel["w1"][hd:2 * hd]], axis=1)
            h, e = _edge_enc_plus_layer(
                h, hs, wh, bh, whs, ee["w2"], ee["b2"],
                rel["w1"][2 * hd:], rel["w2"], rel["b2"],
                obj["w1"][hd:], obj["w2"], obj["b2"],
                alpha=alpha, tn=tn)
        else:
            wh = jnp.concatenate([rel["w1"][:hd], obj["w1"][:hd]], axis=1)
            bh = jnp.concatenate([rel["b1"], obj["b1"]], axis=1)
            h, e = _in_layer(
                h, hs, e, wh, bh, rel["w1"][hd:2 * hd], rel["w1"][2 * hd:],
                rel["w2"], rel["b2"], obj["w1"][hd:], obj["w2"], obj["b2"],
                alpha=alpha, tn=tn)
    return h


# ---------------------------------------------------------------------------
# Deterministic synthetic parameters
# ---------------------------------------------------------------------------
def init_mlp(key, in_dim, hidden, out_dim):
    k1, k2, k3, k4 = jax.random.split(key, 4)
    return {
        "w1": jax.random.normal(k1, (in_dim, hidden), jnp.float32) / (in_dim ** 0.5),
        "b1": 0.1 * jax.random.normal(k2, (1, hidden), jnp.float32),
        "w2": jax.random.normal(k3, (hidden, out_dim), jnp.float32) / (hidden ** 0.5),
        "b2": 0.1 * jax.random.normal(k4, (1, out_dim), jnp.float32),
    }


def init_params(key, indim, h_dim, e_dim, L, hidden_dim):
    keys = jax.random.split(key, 2 + 2 * L)
    return {
        "node_enc": init_mlp(keys[0], 2 * indim, hidden_dim, h_dim),
        "edge_enc": init_mlp(keys[1], 2 * h_dim, hidden_dim, e_dim),
        "layers": [
            {"rel": init_mlp(keys[2 + 2 * l], 2 * h_dim + e_dim, hidden_dim, e_dim),
             "obj": init_mlp(keys[3 + 2 * l], h_dim + e_dim, hidden_dim, h_dim)}
            for l in range(L)
        ],
    }


# ---------------------------------------------------------------------------
# Plain-JAX reference (same weights, same neighbour indices) for validation.
# ---------------------------------------------------------------------------
def reference_forward(x, nbr, params, *, alpha=0.5):
    n = x.shape[0]
    k = nbr.shape[1]
    src = nbr.reshape(-1)                         # edge_index[0]  (neighbour j)
    dst = jnp.repeat(jnp.arange(n), k)            # edge_index[1]  (target i)

    def dot(a, b):
        return jnp.dot(a, b, preferred_element_type=jnp.float32,
                       precision=jax.lax.Precision.HIGHEST)

    def mlp(p, z):
        hid = jnp.maximum(dot(z, p["w1"]) + p["b1"], 0.0)
        return dot(hid, p["w2"]) + p["b2"]

    msg = mlp(params["node_enc"], jnp.concatenate([x[dst], x[src] - x[dst]], axis=1))
    h = jnp.maximum(msg.reshape(n, k, -1).sum(axis=1), 0.0)
    edge_attr = jnp.maximum(
        mlp(params["edge_enc"], jnp.concatenate([h[src], h[dst]], axis=1)), 0.0)
    for layer in params["layers"]:
        e_new = mlp(layer["rel"],
                    jnp.concatenate([h[dst], h[src], edge_attr], axis=1))
        aggr = e_new.reshape(n, k, -1).sum(axis=1)
        delta_h = mlp(layer["obj"], jnp.concatenate([h, aggr], axis=1))
        h = alpha * h + (1 - alpha) * delta_h
        edge_attr = e_new
    return h


if __name__ == "__main__":
    INDIM, H_DIM, E_DIM, HIDDEN, L, K = 8, 16, 16, 32, 2, 8
    N = 256
    ALPHA = 0.5

    key = jax.random.PRNGKey(0)
    kx, kp = jax.random.split(key)
    x = jax.random.normal(kx, (N, INDIM), jnp.float32)
    params = init_params(kp, INDIM, H_DIM, E_DIM, L, HIDDEN)

    nbr = knn_indices(x, K)                       # Pallas distances + lax.top_k

    fwd = jax.jit(inconv_block_forward, static_argnames=("alpha", "tn"))
    h = jax.block_until_ready(fwd(x, nbr, params, alpha=ALPHA))

    assert h.shape == (N, H_DIM) and h.dtype == jnp.float32
    h_ref = reference_forward(x, nbr, params, alpha=ALPHA)
    err = float(jnp.max(jnp.abs(h - h_ref)))
    rel = float(jnp.linalg.norm(h - h_ref) / (float(jnp.linalg.norm(h_ref)) + 1e-12))
    # Kernel matmuls run at DEFAULT precision (single bf16 MXU pass, f32 accum);
    # tolerance is sized for that deliberate speed/accuracy trade.
    assert jnp.allclose(h, h_ref, atol=1e-1, rtol=5e-2), \
        f"max abs err = {err}, rel fro err = {rel}"
    print("KERNEL_OK")
</pallas_src>

<mosaic_0001>
module attributes {stable_mosaic.version = 11 : i64} {
  func.func @_dist_kernel(%arg0: i32, %arg1: memref<128x8xf32, #tpu.memory_space<vmem>>, %arg2: memref<8x256xf32, #tpu.memory_space<vmem>>, %arg3: memref<128x256xf32, #tpu.memory_space<vmem>>) attributes {dimension_semantics = [#tpu.dimension_semantics<parallel>], iteration_bounds = array<i64: 2>, scalar_prefetch = 0 : i64, scratch_operands = 0 : i64, tpu.core_type = #tpu.core_type<tc>, window_params = [{transform_indices = @transform_0, window_bounds = array<i64: 128, 8>}, {pipeline_mode = #tpu.pipeline_mode<synchronous>, transform_indices = @transform_1, window_bounds = array<i64: 8, 256>}, {transform_indices = @transform_2, window_bounds = array<i64: 128, 256>}]} {
    %c0 = arith.constant 0 : index
    %c0_0 = arith.constant 0 : index
    %0 = vector.load %arg1[%c0, %c0_0] : memref<128x8xf32, #tpu.memory_space<vmem>>, vector<128x8xf32>
    %c0_1 = arith.constant 0 : index
    %c0_2 = arith.constant 0 : index
    %1 = vector.load %arg2[%c0_1, %c0_2] : memref<8x256xf32, #tpu.memory_space<vmem>>, vector<8x256xf32>
    %cst = arith.constant 0.000000e+00 : f32
    %2 = vector.broadcast %cst : f32 to vector<128x256xf32>
    %3 = vector.extract_strided_slice %0 {offsets = [0, 0], sizes = [128, 1], strides = [1, 1]} : vector<128x8xf32> to vector<128x1xf32>
    %4 = vector.extract_strided_slice %1 {offsets = [0, 0], sizes = [1, 256], strides = [1, 1]} : vector<8x256xf32> to vector<1x256xf32>
    %5 = vector.broadcast %3 : vector<128x1xf32> to vector<128x256xf32>
    %6 = vector.broadcast %4 : vector<1x256xf32> to vector<128x256xf32>
    %7 = arith.subf %5, %6 : vector<128x256xf32>
    %8 = arith.mulf %7, %7 : vector<128x256xf32>
    %9 = arith.addf %2, %8 : vector<128x256xf32>
    %10 = vector.extract_strided_slice %0 {offsets = [0, 1], sizes = [128, 1], strides = [1, 1]} : vector<128x8xf32> to vector<128x1xf32>
    %11 = vector.extract_strided_slice %1 {offsets = [1, 0], sizes = [1, 256], strides = [1, 1]} : vector<8x256xf32> to vector<1x256xf32>
    %12 = vector.broadcast %10 : vector<128x1xf32> to vector<128x256xf32>
    %13 = vector.broadcast %11 : vector<1x256xf32> to vector<128x256xf32>
    %14 = arith.subf %12, %13 : vector<128x256xf32>
    %15 = arith.mulf %14, %14 : vector<128x256xf32>
    %16 = arith.addf %9, %15 : vector<128x256xf32>
    %17 = vector.extract_strided_slice %0 {offsets = [0, 2], sizes = [128, 1], strides = [1, 1]} : vector<128x8xf32> to vector<128x1xf32>
    %18 = vector.extract_strided_slice %1 {offsets = [2, 0], sizes = [1, 256], strides = [1, 1]} : vector<8x256xf32> to vector<1x256xf32>
    %19 = vector.broadcast %17 : vector<128x1xf32> to vector<128x256xf32>
    %20 = vector.broadcast %18 : vector<1x256xf32> to vector<128x256xf32>
    %21 = arith.subf %19, %20 : vector<128x256xf32>
    %22 = arith.mulf %21, %21 : vector<128x256xf32>
    %23 = arith.addf %16, %22 : vector<128x256xf32>
    %24 = vector.extract_strided_slice %0 {offsets = [0, 3], sizes = [128, 1], strides = [1, 1]} : vector<128x8xf32> to vector<128x1xf32>
    %25 = vector.extract_strided_slice %1 {offsets = [3, 0], sizes = [1, 256], strides = [1, 1]} : vector<8x256xf32> to vector<1x256xf32>
    %26 = vector.broadcast %24 : vector<128x1xf32> to vector<128x256xf32>
    %27 = vector.broadcast %25 : vector<1x256xf32> to vector<128x256xf32>
    %28 = arith.subf %26, %27 : vector<128x256xf32>
    %29 = arith.mulf %28, %28 : vector<128x256xf32>
    %30 = arith.addf %23, %29 : vector<128x256xf32>
    %31 = vector.extract_strided_slice %0 {offsets = [0, 4], sizes = [128, 1], strides = [1, 1]} : vector<128x8xf32> to vector<128x1xf32>
    %32 = vector.extract_strided_slice %1 {offsets = [4, 0], sizes = [1, 256], strides = [1, 1]} : vector<8x256xf32> to vector<1x256xf32>
    %33 = vector.broadcast %31 : vector<128x1xf32> to vector<128x256xf32>
    %34 = vector.broadcast %32 : vector<1x256xf32> to vector<128x256xf32>
    %35 = arith.subf %33, %34 : vector<128x256xf32>
    %36 = arith.mulf %35, %35 : vector<128x256xf32>
    %37 = arith.addf %30, %36 : vector<128x256xf32>
    %38 = vector.extract_strided_slice %0 {offsets = [0, 5], sizes = [128, 1], strides = [1, 1]} : vector<128x8xf32> to vector<128x1xf32>
    %39 = vector.extract_strided_slice %1 {offsets = [5, 0], sizes = [1, 256], strides = [1, 1]} : vector<8x256xf32> to vector<1x256xf32>
    %40 = vector.broadcast %38 : vector<128x1xf32> to vector<128x256xf32>
    %41 = vector.broadcast %39 : vector<1x256xf32> to vector<128x256xf32>
    %42 = arith.subf %40, %41 : vector<128x256xf32>
    %43 = arith.mulf %42, %42 : vector<128x256xf32>
    %44 = arith.addf %37, %43 : vector<128x256xf32>
    %45 = vector.extract_strided_slice %0 {offsets = [0, 6], sizes = [128, 1], strides = [1, 1]} : vector<128x8xf32> to vector<128x1xf32>
    %46 = vector.extract_strided_slice %1 {offsets = [6, 0], sizes = [1, 256], strides = [1, 1]} : vector<8x256xf32> to vector<1x256xf32>
    %47 = vector.broadcast %45 : vector<128x1xf32> to vector<128x256xf32>
    %48 = vector.broadcast %46 : vector<1x256xf32> to vector<128x256xf32>
    %49 = arith.subf %47, %48 : vector<128x256xf32>
    %50 = arith.mulf %49, %49 : vector<128x256xf32>
    %51 = arith.addf %44, %50 : vector<128x256xf32>
    %52 = vector.extract_strided_slice %0 {offsets = [0, 7], sizes = [128, 1], strides = [1, 1]} : vector<128x8xf32> to vector<128x1xf32>
    %53 = vector.extract_strided_slice %1 {offsets = [7, 0], sizes = [1, 256], strides = [1, 1]} : vector<8x256xf32> to vector<1x256xf32>
    %54 = vector.broadcast %52 : vector<128x1xf32> to vector<128x256xf32>
    %55 = vector.broadcast %53 : vector<1x256xf32> to vector<128x256xf32>
    %56 = arith.subf %54, %55 : vector<128x256xf32>
    %57 = arith.mulf %56, %56 : vector<128x256xf32>
    %58 = arith.addf %51, %57 : vector<128x256xf32>
    %c128_i32 = arith.constant 128 : i32
    %59 = arith.muli %arg0, %c128_i32 : i32
    %60 = tpu.iota {dimensions = array<i32: 0>} : vector<128x256xi32>
    %61 = vector.broadcast %59 : i32 to vector<128x256xi32>
    %62 = arith.addi %61, %60 : vector<128x256xi32>
    %63 = tpu.iota {dimensions = array<i32: 1>} : vector<128x256xi32>
    %64 = arith.cmpi eq, %62, %63 : vector<128x256xi32>
    %cst_3 = arith.constant 1.000000e+30 : f32
    %65 = vector.broadcast %cst_3 : f32 to vector<128x256xf32>
    %66 = arith.select %64, %65, %58 : vector<128x256xi1>, vector<128x256xf32>
    %c0_4 = arith.constant 0 : index
    %c0_5 = arith.constant 0 : index
    %67 = vector.load %arg3[%c0_4, %c0_5] : memref<128x256xf32, #tpu.memory_space<vmem>>, vector<128x256xf32>
    tpu.vector_store %arg3[%c0_4, %c0_5], %66 {strides = array<i32>} : memref<128x256xf32, #tpu.memory_space<vmem>>, vector<128x256xf32>,
    return
  }
  func.func @transform_0(%arg0: i32) -> (i32, i32) {
    %c0_i32 = arith.constant 0 : i32
    %c0_i32_0 = arith.constant 0 : i32
    return %arg0, %c0_i32 : i32, i32
  }
  func.func @transform_1(%arg0: i32) -> (i32, i32) {
    %c0_i32 = arith.constant 0 : i32
    %c0_i32_0 = arith.constant 0 : i32
    %c0_i32_1 = arith.constant 0 : i32
    return %c0_i32, %c0_i32_0 : i32, i32
  }
  func.func @transform_2(%arg0: i32) -> (i32, i32) {
    %c0_i32 = arith.constant 0 : i32
    %c0_i32_0 = arith.constant 0 : i32
    return %arg0, %c0_i32 : i32, i32
  }
}

</mosaic_0001>

<llo_original>
// kernel: tpu_custom_call.1
$region0: #{tpu_custom_call.1}
  #allocation0 [shape = 'u32[]', space=smem, size = 0x4, offset = 0x4, fixed_abs, tag = 'smem constant byte address 0x4 - core index']
  #allocation1 [shape = 'u32[144,128]{1,0:T(1,128)}', space=vmem, size = 0x12000, scoped, tag = 'internal scratch']
  %s0 = inlined_call_operand.vmem [shape: f32[256,8], index: 0, kind: input, shape index: {}]
  %s1 = inlined_call_operand.vmem [shape: f32[8,256], index: 1, kind: input, shape index: {}]
  %s2 = inlined_call_operand.hbm [shape: f32[256,256], index: 2, kind: output, shape index: {}]
  %s3 = sld [smem:[#allocation0]]
  $region41: #{tpu_custom_call.1} parent=0
    _
  %s5 = ssub.s32 1, %s3
  %s6 = scalar_select 0, %s5, %s3
  $region1: #{tpu_custom_call.1} parent=0
    #allocation2 [shape = 'u8[262144]{0}', space=vmem, size = 0x40000, scoped, tag = 'output window, operand 0']
    #allocation3 [shape = 's32[2]{0}', space=sflag, size = 0x8, scoped, tag = 'scoped memory for tpu_custom_call.1']
    %7 = vsyncpa [#allocation3], 0
    %s8 = scalar_lea.sflag [#allocation3], 1
    %9 = vsyncpa %s8, 0
    loop: start=0, step=1, limit=4
    $region2: #{tpu_custom_call.1} parent=1 // loop_pre_header
      _
    $region3: #{tpu_custom_call.1} parent=1 // loop_header
      %s11 = sphi 0, %s15
      %p12 = scmp.ge.s32.totalorder %s11, 4
      %s21 = sphi 0, %s23
      %s24 = sphi 0, %s21
      %s25 = sphi 0, %s24
      %s41 = sphi 0, %s25
      %s45 = sphi 0, %s45
      %s47 = sphi 0, %s45
      %s48 = sphi 0, %s47
      %s62 = sphi 0, %s48
      %s68 = sphi 0, %s70
      %s71 = sphi 0, %s68
      %s72 = sphi 0, %s71
      %s88 = sphi 0, %s72
    $region4: #{tpu_custom_call.1} parent=1 // loop_header_branch
      %14 = sbr.rel (%p12) target = $region8
    $region5: #{tpu_custom_call.1} parent=1 // loop_body
      %s16 = ssub.s32 %s11, 1
      %s17 = ssub.s32 %s11, 2
      %s18 = sadd.s32 %s11, 1
      %s19 = ssub.s32 %s11, %s18
      %p20 = scmp.eq.s32.totalorder %s19, 0
      %s22 = sadd.s32 %s21, 1
      %s23 = scalar_select %p20, %s21, %s22
      %p26 = pneg %p20
      %p27 = scmp.eq.s32.totalorder %s11, 1
      %p28 = por %p26, %p27
      %p29 = scmp.ne.s32.totalorder %s21, %s24
      %p30 = scmp.eq.s32.totalorder %s11, 0
      %p31 = por %p29, %p30
      %p32 = scmp.ne.s32.totalorder %s21, %s24
      %p33 = scmp.eq.s32.totalorder %s16, 1
      %p34 = por %p32, %p33
      %p35 = scmp.ne.s32.totalorder %s24, %s25
      %p36 = scmp.eq.s32.totalorder %s16, 0
      %p37 = por %p35, %p36
      %p38 = scmp.ne.s32.totalorder %s24, %s25
      %p39 = scmp.eq.s32.totalorder %s17, 1
      %p40 = por %p38, %p39
      %p42 = scmp.ne.s32.totalorder %s25, %s41
      %p43 = scmp.eq.s32.totalorder %s17, 0
      %p44 = por %p42, %p43
      %s46 = sadd.s32 %s45, 1
      %p49 = scmp.eq.s32.totalorder %s11, 1
      %p50 = scmp.ne.s32.totalorder %s45, %s47
      %p51 = scmp.eq.s32.totalorder %s11, 0
      %p52 = por %p50, %p51
      %p53 = scmp.ne.s32.totalorder %s45, %s47
      %p54 = scmp.eq.s32.totalorder %s16, 1
      %p55 = por %p53, %p54
      %p56 = scmp.ne.s32.totalorder %s47, %s48
      %p57 = scmp.eq.s32.totalorder %s16, 0
      %p58 = por %p56, %p57
      %p59 = scmp.ne.s32.totalorder %s47, %s48
      %p60 = scmp.eq.s32.totalorder %s17, 1
      %p61 = por %p59, %p60
      %p63 = scmp.ne.s32.totalorder %s48, %s62
      %p64 = scmp.eq.s32.totalorder %s17, 0
      %p65 = por %p63, %p64
      %s66 = ssub.s32 %s11, %s18
      %p67 = scmp.eq.s32.totalorder %s66, 0
      %s69 = sadd.s32 %s68, 1
      %s70 = scalar_select %p67, %s68, %s69
      %p73 = pneg %p67
      %p74 = scmp.eq.s32.totalorder %s11, 1
      %p75 = por %p73, %p74
      %p76 = scmp.ne.s32.totalorder %s68, %s71
      %p77 = scmp.eq.s32.totalorder %s11, 0
      %p78 = por %p76, %p77
      %p79 = scmp.ne.s32.totalorder %s68, %s71
      %p80 = scmp.eq.s32.totalorder %s16, 1
      %p81 = por %p79, %p80
      %p82 = scmp.ne.s32.totalorder %s71, %s72
      %p83 = scmp.eq.s32.totalorder %s16, 0
      %p84 = por %p82, %p83
      %p85 = scmp.ne.s32.totalorder %s71, %s72
      %p86 = scmp.eq.s32.totalorder %s17, 1
      %p87 = por %p85, %p86
      %p89 = scmp.ne.s32.totalorder %s72, %s88
      %p90 = scmp.eq.s32.totalorder %s17, 0
      %p91 = por %p89, %p90
      %p92 = scmp.le.s32.totalorder 1, %s11
      %p93 = scmp.lt.s32.totalorder %s11, 3
      %p94 = pnand %p92, %p93
      %p95 = pneg %p94
      // Predicated region
      $region9: #{tpu_custom_call.1} parent=5 // pred_check
        _
      $region10: #{tpu_custom_call.1} parent=5 // pred_check_branch
        %97 = sbr.rel (%p94) target = $region12
      $region11: #{tpu_custom_call.1} parent=5 // pred_region
        %s98 = ssub.s32 %s11, 1
        // Predicated region
        $region13: #{tpu_custom_call.1} parent=11 // pred_check
          %p99 = pneg %p58
        $region14: #{tpu_custom_call.1} parent=11 // pred_check_branch
          %101 = sbr.rel (%p99) target = $region16
        $region15: #{tpu_custom_call.1} parent=11 // pred_region
          _
        $region16: #{tpu_custom_call.1} parent=11 // pred_fallthru
          _
      $region12: #{tpu_custom_call.1} parent=5 // pred_fallthru
        _
      %p102 = scmp.lt.s32.totalorder %s11, 2
      // Predicated region
      $region17: #{tpu_custom_call.1} parent=5 // pred_check
        %p103 = pneg %p102
      $region18: #{tpu_custom_call.1} parent=5 // pred_check_branch
        %105 = sbr.rel (%p103) target = $region20
      $region19: #{tpu_custom_call.1} parent=5 // pred_region
        // Predicated region
        $region21: #{tpu_custom_call.1} parent=19 // pred_check
          %p106 = pneg %p31
        $region22: #{tpu_custom_call.1} parent=19 // pred_check_branch
          %108 = sbr.rel (%p106) target = $region24
        $region23: #{tpu_custom_call.1} parent=19 // pred_region
          %s109 = smul.u32 16, %s11
          %p110 = scmp.lt.s32.totalorder %s109, 31
          %s111 = scalar_select %p110, %s109, 31
          %s112 = smul.addr %s111, 8
          %s113 = scalar_lea.vmem %s0, %s112
          %s114 = smul.u32 16, %s11
        $region24: #{tpu_custom_call.1} parent=19 // pred_fallthru
          _
      $region20: #{tpu_custom_call.1} parent=5 // pred_fallthru
        _
      %p115 = scmp.le.s32.totalorder 1, %s11
      %p116 = scmp.lt.s32.totalorder %s11, 3
      %p117 = pnand %p115, %p116
      %p118 = pneg %p117
      // Predicated region
      $region25: #{tpu_custom_call.1} parent=5 // pred_check
        _
      $region26: #{tpu_custom_call.1} parent=5 // pred_check_branch
        %120 = sbr.rel (%p117) target = $region28
      $region27: #{tpu_custom_call.1} parent=5 // pred_region
        %s121 = ssub.s32 %s11, 1
        %s122 = smul.u32 16, %s16
        %p123 = scmp.lt.s32.totalorder %s122, 31
        %s124 = scalar_select %p123, %s122, 31
        %s125 = smul.addr %s124, 8
        %s126 = scalar_lea.vmem %s0, %s125
        %p127 = pneg %p37
        %p128 = pneg %p34
        %p129 = pneg %p58
        %p130 = pneg %p55
        %p131 = pneg %p84
        %p132 = pneg %p81
        %s133 = sand.u32 %s71, 1
        %s134 = scalar_lea.sflag [#allocation3], %s133
        %s135 = sand.u32 %s71, 1
        %s136 = smul.addr %s135, 256
        %s137 = scalar_lea.vmem [#allocation2], %s136
        %s138 = smul.u32 16, %s16
        %p139 = scmp.lt.s32.totalorder %s138, 31
        %s140 = scalar_select %p139, %s138, 31
        %s141 = smul.addr %s140, 8
        %s142 = scalar_lea.vmem %s0, %s141
        %s143 = smul.u32 16, %s16
        %s144 = smul.u32 16, %s16
        %v145 = vld [vmem:[%s142] sm:$0xff]
        %v146 = vld [vmem:[%s142 + $0x8] sm:$0xff]
        %v147 = vld [vmem:[%s142 + $0x10] sm:$0xff]
        %v148 = vld [vmem:[%s142 + $0x18] sm:$0xff]
        %v149 = vld [vmem:[%s142 + $0x20] sm:$0xff]
        %v150 = vld [vmem:[%s142 + $0x28] sm:$0xff]
        %v151 = vld [vmem:[%s142 + $0x30] sm:$0xff]
        %v152 = vld [vmem:[%s142 + $0x38] sm:$0xff]
        %v153 = vld [vmem:[%s142 + $0x40] sm:$0xff]
        %v154 = vld [vmem:[%s142 + $0x48] sm:$0xff]
        %v155 = vld [vmem:[%s142 + $0x50] sm:$0xff]
        %v156 = vld [vmem:[%s142 + $0x58] sm:$0xff]
        %v157 = vld [vmem:[%s142 + $0x60] sm:$0xff]
        %v158 = vld [vmem:[%s142 + $0x68] sm:$0xff]
        %v159 = vld [vmem:[%s142 + $0x70] sm:$0xff]
        %v160 = vld [vmem:[%s142 + $0x78] sm:$0xff]
        %v161 = vld [vmem:[%s1] sm:$0xff]
        %v162 = vld [vmem:[%s1 + $0x8] sm:$0xff]
        %164 = vset.pattern.permute.xlu0 0
        %165 = vperm.xlu0 %164, %v145
        %v166 = vpop.permute.xlu0 %165
        %169 = vset.pattern.permute.xlu0 0
        %170 = vperm.xlu0 %169, %v146
        %v171 = vpop.permute.xlu0 %170
        %174 = vset.pattern.permute.xlu0 0
        %175 = vperm.xlu0 %174, %v147
        %v176 = vpop.permute.xlu0 %175
        %179 = vset.pattern.permute.xlu0 0
        %180 = vperm.xlu0 %179, %v148
        %v181 = vpop.permute.xlu0 %180
        %184 = vset.pattern.permute.xlu0 0
        %185 = vperm.xlu0 %184, %v149
        %v186 = vpop.permute.xlu0 %185
        %189 = vset.pattern.permute.xlu0 0
        %190 = vperm.xlu0 %189, %v150
        %v191 = vpop.permute.xlu0 %190
        %194 = vset.pattern.permute.xlu0 0
        %195 = vperm.xlu0 %194, %v151
        %v196 = vpop.permute.xlu0 %195
        %199 = vset.pattern.permute.xlu0 0
        %200 = vperm.xlu0 %199, %v152
        %v201 = vpop.permute.xlu0 %200
        %204 = vset.pattern.permute.xlu0 0
        %205 = vperm.xlu0 %204, %v153
        %v206 = vpop.permute.xlu0 %205
        %209 = vset.pattern.permute.xlu0 0
        %210 = vperm.xlu0 %209, %v154
        %v211 = vpop.permute.xlu0 %210
        %214 = vset.pattern.permute.xlu0 0
        %215 = vperm.xlu0 %214, %v155
        %v216 = vpop.permute.xlu0 %215
        %219 = vset.pattern.permute.xlu0 0
        %220 = vperm.xlu0 %219, %v156
        %v221 = vpop.permute.xlu0 %220
        %224 = vset.pattern.permute.xlu0 0
        %225 = vperm.xlu0 %224, %v157
        %v226 = vpop.permute.xlu0 %225
        %229 = vset.pattern.permute.xlu0 0
        %230 = vperm.xlu0 %229, %v158
        %v231 = vpop.permute.xlu0 %230
        %234 = vset.pattern.permute.xlu0 0
        %235 = vperm.xlu0 %234, %v159
        %v236 = vpop.permute.xlu0 %235
        %239 = vset.pattern.permute.xlu0 0
        %240 = vperm.xlu0 %239, %v160
        %v241 = vpop.permute.xlu0 %240
        %v243 = vlaneseq
        %v244 = vshrl.u32 %v243, 7
        %v245 = vsub.s32 0, %v244
        %v246 = vrot.slane %v161, %v245
        %v247 = vlaneseq
        %v248 = vshrl.u32 %v247, 7
        %v249 = vsub.s32 0, %v248
        %v250 = vrot.slane %v162, %v249
        %v251 = vsub.f32 %v166, %v246
        %v252 = vsub.f32 %v166, %v250
        %v253 = vsub.f32 %v171, %v246
        %v254 = vsub.f32 %v171, %v250
        %v255 = vsub.f32 %v176, %v246
        %v256 = vsub.f32 %v176, %v250
        %v257 = vsub.f32 %v181, %v246
        %v258 = vsub.f32 %v181, %v250
        %v259 = vsub.f32 %v186, %v246
        %v260 = vsub.f32 %v186, %v250
        %v261 = vsub.f32 %v191, %v246
        %v262 = vsub.f32 %v191, %v250
        %v263 = vsub.f32 %v196, %v246
        %v264 = vsub.f32 %v196, %v250
        %v265 = vsub.f32 %v201, %v246
        %v266 = vsub.f32 %v201, %v250
        %v267 = vsub.f32 %v206, %v246
        %v268 = vsub.f32 %v206, %v250
        %v269 = vsub.f32 %v211, %v246
        %v270 = vsub.f32 %v211, %v250
        %v271 = vsub.f32 %v216, %v246
        %v272 = vsub.f32 %v216, %v250
        %v273 = vsub.f32 %v221, %v246
        %v274 = vsub.f32 %v221, %v250
        %v275 = vsub.f32 %v226, %v246
        %v276 = vsub.f32 %v226, %v250
        %v277 = vsub.f32 %v231, %v246
        %v278 = vsub.f32 %v231, %v250
        %v279 = vsub.f32 %v236, %v246
        %v280 = vsub.f32 %v236, %v250
        %v281 = vsub.f32 %v241, %v246
        %v282 = vsub.f32 %v241, %v250
        %v283 = vmul.f32 %v251, %v251
        %v284 = vmul.f32 %v252, %v252
        %v285 = vmul.f32 %v253, %v253
        %v286 = vmul.f32 %v254, %v254
        %v287 = vmul.f32 %v255, %v255
        %v288 = vmul.f32 %v256, %v256
        %v289 = vmul.f32 %v257, %v257
        %v290 = vmul.f32 %v258, %v258
        %v291 = vmul.f32 %v259, %v259
        %v292 = vmul.f32 %v260, %v260
        %v293 = vmul.f32 %v261, %v261
        %v294 = vmul.f32 %v262, %v262
        %v295 = vmul.f32 %v263, %v263
        %v296 = vmul.f32 %v264, %v264
        %v297 = vmul.f32 %v265, %v265
        %v298 = vmul.f32 %v266, %v266
        %v299 = vmul.f32 %v267, %v267
        %v300 = vmul.f32 %v268, %v268
        %v301 = vmul.f32 %v269, %v269
        %v302 = vmul.f32 %v270, %v270
        %v303 = vmul.f32 %v271, %v271
        %v304 = vmul.f32 %v272, %v272
        %v305 = vmul.f32 %v273, %v273
        %v306 = vmul.f32 %v274, %v274
        %v307 = vmul.f32 %v275, %v275
        %v308 = vmul.f32 %v276, %v276
        %v309 = vmul.f32 %v277, %v277
        %v310 = vmul.f32 %v278, %v278
        %v311 = vmul.f32 %v279, %v279
        %v312 = vmul.f32 %v280, %v280
        %v313 = vmul.f32 %v281, %v281
        %v314 = vmul.f32 %v282, %v282
        %v315 = vadd.f32 %v283, 0.0
        %v316 = vadd.f32 %v284, 0.0
        %v317 = vadd.f32 %v285, 0.0
        %v318 = vadd.f32 %v286, 0.0
        %v319 = vadd.f32 %v287, 0.0
        %v320 = vadd.f32 %v288, 0.0
        %v321 = vadd.f32 %v289, 0.0
        %v322 = vadd.f32 %v290, 0.0
        %v323 = vadd.f32 %v291, 0.0
        %v324 = vadd.f32 %v292, 0.0
        %v325 = vadd.f32 %v293, 0.0
        %v326 = vadd.f32 %v294, 0.0
        %v327 = vadd.f32 %v295, 0.0
        %v328 = vadd.f32 %v296, 0.0
        %v329 = vadd.f32 %v297, 0.0
        %v330 = vadd.f32 %v298, 0.0
        %v331 = vadd.f32 %v299, 0.0
        %v332 = vadd.f32 %v300, 0.0
        %v333 = vadd.f32 %v301, 0.0
        %v334 = vadd.f32 %v302, 0.0
        %v335 = vadd.f32 %v303, 0.0
        %v336 = vadd.f32 %v304, 0.0
        %v337 = vadd.f32 %v305, 0.0
        %v338 = vadd.f32 %v306, 0.0
        %v339 = vadd.f32 %v307, 0.0
        %v340 = vadd.f32 %v308, 0.0
        %v341 = vadd.f32 %v309, 0.0
        %v342 = vadd.f32 %v310, 0.0
        %v343 = vadd.f32 %v311, 0.0
        %v344 = vadd.f32 %v312, 0.0
        %v345 = vadd.f32 %v313, 0.0
        %v346 = vadd.f32 %v314, 0.0
        %347 = vset.pattern.permute.xlu0 1
        %348 = vperm.xlu0 %347, %v145
        %v349 = vpop.permute.xlu0 %348
        %351 = vset.pattern.permute.xlu0 1
        %352 = vperm.xlu0 %351, %v146
        %v353 = vpop.permute.xlu0 %352
        %355 = vset.pattern.permute.xlu0 1
        %356 = vperm.xlu0 %355, %v147
        %v357 = vpop.permute.xlu0 %356
        %359 = vset.pattern.permute.xlu0 1
        %360 = vperm.xlu0 %359, %v148
        %v361 = vpop.permute.xlu0 %360
        %363 = vset.pattern.permute.xlu0 1
        %364 = vperm.xlu0 %363, %v149
        %v365 = vpop.permute.xlu0 %364
        %367 = vset.pattern.permute.xlu0 1
        %368 = vperm.xlu0 %367, %v150
        %v369 = vpop.permute.xlu0 %368
        %371 = vset.pattern.permute.xlu0 1
        %372 = vperm.xlu0 %371, %v151
        %v373 = vpop.permute.xlu0 %372
        %375 = vset.pattern.permute.xlu0 1
        %376 = vperm.xlu0 %375, %v152
        %v377 = vpop.permute.xlu0 %376
        %379 = vset.pattern.permute.xlu0 1
        %380 = vperm.xlu0 %379, %v153
        %v381 = vpop.permute.xlu0 %380
        %383 = vset.pattern.permute.xlu0 1
        %384 = vperm.xlu0 %383, %v154
        %v385 = vpop.permute.xlu0 %384
        %387 = vset.pattern.permute.xlu0 1
        %388 = vperm.xlu0 %387, %v155
        %v389 = vpop.permute.xlu0 %388
        %391 = vset.pattern.permute.xlu0 1
        %392 = vperm.xlu0 %391, %v156
        %v393 = vpop.permute.xlu0 %392
        %395 = vset.pattern.permute.xlu0 1
        %396 = vperm.xlu0 %395, %v157
        %v397 = vpop.permute.xlu0 %396
        %399 = vset.pattern.permute.xlu0 1
        %400 = vperm.xlu0 %399, %v158
        %v401 = vpop.permute.xlu0 %400
        %403 = vset.pattern.permute.xlu0 1
        %404 = vperm.xlu0 %403, %v159
        %v405 = vpop.permute.xlu0 %404
        %407 = vset.pattern.permute.xlu0 1
        %408 = vperm.xlu0 %407, %v160
        %v409 = vpop.permute.xlu0 %408
        %v411 = vlaneseq
        %v412 = vshrl.u32 %v411, 7
        %v413 = vsub.s32 1, %v412
        %v414 = vrot.slane %v161, %v413
        %v415 = vlaneseq
        %v416 = vshrl.u32 %v415, 7
        %v417 = vsub.s32 1, %v416
        %v418 = vrot.slane %v162, %v417
        %v419 = vsub.f32 %v349, %v414
        %v420 = vsub.f32 %v349, %v418
        %v421 = vsub.f32 %v353, %v414
        %v422 = vsub.f32 %v353, %v418
        %v423 = vsub.f32 %v357, %v414
        %v424 = vsub.f32 %v357, %v418
        %v425 = vsub.f32 %v361, %v414
        %v426 = vsub.f32 %v361, %v418
        %v427 = vsub.f32 %v365, %v414
        %v428 = vsub.f32 %v365, %v418
        %v429 = vsub.f32 %v369, %v414
        %v430 = vsub.f32 %v369, %v418
        %v431 = vsub.f32 %v373, %v414
        %v432 = vsub.f32 %v373, %v418
        %v433 = vsub.f32 %v377, %v414
        %v434 = vsub.f32 %v377, %v418
        %v435 = vsub.f32 %v381, %v414
        %v436 = vsub.f32 %v381, %v418
        %v437 = vsub.f32 %v385, %v414
        %v438 = vsub.f32 %v385, %v418
        %v439 = vsub.f32 %v389, %v414
        %v440 = vsub.f32 %v389, %v418
        %v441 = vsub.f32 %v393, %v414
        %v442 = vsub.f32 %v393, %v418
        %v443 = vsub.f32 %v397, %v414
        %v444 = vsub.f32 %v397, %v418
        %v445 = vsub.f32 %v401, %v414
        %v446 = vsub.f32 %v401, %v418
        %v447 = vsub.f32 %v405, %v414
        %v448 = vsub.f32 %v405, %v418
        %v449 = vsub.f32 %v409, %v414
        %v450 = vsub.f32 %v409, %v418
        %v451 = vmul.f32 %v419, %v419
        %v452 = vmul.f32 %v420, %v420
        %v453 = vmul.f32 %v421, %v421
        %v454 = vmul.f32 %v422, %v422
        %v455 = vmul.f32 %v423, %v423
        %v456 = vmul.f32 %v424, %v424
        %v457 = vmul.f32 %v425, %v425
        %v458 = vmul.f32 %v426, %v426
        %v459 = vmul.f32 %v427, %v427
        %v460 = vmul.f32 %v428, %v428
        %v461 = vmul.f32 %v429, %v429
        %v462 = vmul.f32 %v430, %v430
        %v463 = vmul.f32 %v431, %v431
        %v464 = vmul.f32 %v432, %v432
        %v465 = vmul.f32 %v433, %v433
        %v466 = vmul.f32 %v434, %v434
        %v467 = vmul.f32 %v435, %v435
        %v468 = vmul.f32 %v436, %v436
        %v469 = vmul.f32 %v437, %v437
        %v470 = vmul.f32 %v438, %v438
        %v471 = vmul.f32 %v439, %v439
        %v472 = vmul.f32 %v440, %v440
        %v473 = vmul.f32 %v441, %v441
        %v474 = vmul.f32 %v442, %v442
        %v475 = vmul.f32 %v443, %v443
        %v476 = vmul.f32 %v444, %v444
        %v477 = vmul.f32 %v445, %v445
        %v478 = vmul.f32 %v446, %v446
        %v479 = vmul.f32 %v447, %v447
        %v480 = vmul.f32 %v448, %v448
        %v481 = vmul.f32 %v449, %v449
        %v482 = vmul.f32 %v450, %v450
        %v483 = vadd.f32 %v315, %v451
        %v484 = vadd.f32 %v316, %v452
        %v485 = vadd.f32 %v317, %v453
        %v486 = vadd.f32 %v318, %v454
        %v487 = vadd.f32 %v319, %v455
        %v488 = vadd.f32 %v320, %v456
        %v489 = vadd.f32 %v321, %v457
        %v490 = vadd.f32 %v322, %v458
        %v491 = vadd.f32 %v323, %v459
        %v492 = vadd.f32 %v324, %v460
        %v493 = vadd.f32 %v325, %v461
        %v494 = vadd.f32 %v326, %v462
        %v495 = vadd.f32 %v327, %v463
        %v496 = vadd.f32 %v328, %v464
        %v497 = vadd.f32 %v329, %v465
        %v498 = vadd.f32 %v330, %v466
        %v499 = vadd.f32 %v331, %v467
        %v500 = vadd.f32 %v332, %v468
        %v501 = vadd.f32 %v333, %v469
        %v502 = vadd.f32 %v334, %v470
        %v503 = vadd.f32 %v335, %v471
        %v504 = vadd.f32 %v336, %v472
        %v505 = vadd.f32 %v337, %v473
        %v506 = vadd.f32 %v338, %v474
        %v507 = vadd.f32 %v339, %v475
        %v508 = vadd.f32 %v340, %v476
        %v509 = vadd.f32 %v341, %v477
        %v510 = vadd.f32 %v342, %v478
        %v511 = vadd.f32 %v343, %v479
        %v512 = vadd.f32 %v344, %v480
        %v513 = vadd.f32 %v345, %v481
        %v514 = vadd.f32 %v346, %v482
        %515 = vset.pattern.permute.xlu0 2
        %516 = vperm.xlu0 %515, %v145
        %v517 = vpop.permute.xlu0 %516
        %519 = vset.pattern.permute.xlu0 2
        %520 = vperm.xlu0 %519, %v146
        %v521 = vpop.permute.xlu0 %520
        %523 = vset.pattern.permute.xlu0 2
        %524 = vperm.xlu0 %523, %v147
        %v525 = vpop.permute.xlu0 %524
        %527 = vset.pattern.permute.xlu0 2
        %528 = vperm.xlu0 %527, %v148
        %v529 = vpop.permute.xlu0 %528
        %531 = vset.pattern.permute.xlu0 2
        %532 = vperm.xlu0 %531, %v149
        %v533 = vpop.permute.xlu0 %532
        %535 = vset.pattern.permute.xlu0 2
        %536 = vperm.xlu0 %535, %v150
        %v537 = vpop.permute.xlu0 %536
        %539 = vset.pattern.permute.xlu0 2
        %540 = vperm.xlu0 %539, %v151
        %v541 = vpop.permute.xlu0 %540
        %543 = vset.pattern.permute.xlu0 2
        %544 = vperm.xlu0 %543, %v152
        %v545 = vpop.permute.xlu0 %544
        %547 = vset.pattern.permute.xlu0 2
        %548 = vperm.xlu0 %547, %v153
        %v549 = vpop.permute.xlu0 %548
        %551 = vset.pattern.permute.xlu0 2
        %552 = vperm.xlu0 %551, %v154
        %v553 = vpop.permute.xlu0 %552
        %555 = vset.pattern.permute.xlu0 2
        %556 = vperm.xlu0 %555, %v155
        %v557 = vpop.permute.xlu0 %556
        %559 = vset.pattern.permute.xlu0 2
        %560 = vperm.xlu0 %559, %v156
        %v561 = vpop.permute.xlu0 %560
        %563 = vset.pattern.permute.xlu0 2
        %564 = vperm.xlu0 %563, %v157
        %v565 = vpop.permute.xlu0 %564
        %567 = vset.pattern.permute.xlu0 2
        %568 = vperm.xlu0 %567, %v158
        %v569 = vpop.permute.xlu0 %568
        %571 = vset.pattern.permute.xlu0 2
        %572 = vperm.xlu0 %571, %v159
        %v573 = vpop.permute.xlu0 %572
        %575 = vset.pattern.permute.xlu0 2
        %576 = vperm.xlu0 %575, %v160
        %v577 = vpop.permute.xlu0 %576
        %v579 = vlaneseq
        %v580 = vshrl.u32 %v579, 7
        %v581 = vsub.s32 2, %v580
        %v582 = vrot.slane %v161, %v581
        %v583 = vlaneseq
        %v584 = vshrl.u32 %v583, 7
        %v585 = vsub.s32 2, %v584
        %v586 = vrot.slane %v162, %v585
        %v587 = vsub.f32 %v517, %v582
        %v588 = vsub.f32 %v517, %v586
        %v589 = vsub.f32 %v521, %v582
        %v590 = vsub.f32 %v521, %v586
        %v591 = vsub.f32 %v525, %v582
        %v592 = vsub.f32 %v525, %v586
        %v593 = vsub.f32 %v529, %v582
        %v594 = vsub.f32 %v529, %v586
        %v595 = vsub.f32 %v533, %v582
        %v596 = vsub.f32 %v533, %v586
        %v597 = vsub.f32 %v537, %v582
        %v598 = vsub.f32 %v537, %v586
        %v599 = vsub.f32 %v541, %v582
        %v600 = vsub.f32 %v541, %v586
        %v601 = vsub.f32 %v545, %v582
        %v602 = vsub.f32 %v545, %v586
        %v603 = vsub.f32 %v549, %v582
        %v604 = vsub.f32 %v549, %v586
        %v605 = vsub.f32 %v553, %v582
        %v606 = vsub.f32 %v553, %v586
        %v607 = vsub.f32 %v557, %v582
        %v608 = vsub.f32 %v557, %v586
        %v609 = vsub.f32 %v561, %v582
        %v610 = vsub.f32 %v561, %v586
        %v611 = vsub.f32 %v565, %v582
        %v612 = vsub.f32 %v565, %v586
        %v613 = vsub.f32 %v569, %v582
        %v614 = vsub.f32 %v569, %v586
        %v615 = vsub.f32 %v573, %v582
        %v616 = vsub.f32 %v573, %v586
        %v617 = vsub.f32 %v577, %v582
        %v618 = vsub.f32 %v577, %v586
        %v619 = vmul.f32 %v587, %v587
        %v620 = vmul.f32 %v588, %v588
        %v621 = vmul.f32 %v589, %v589
        %v622 = vmul.f32 %v590, %v590
        %v623 = vmul.f32 %v591, %v591
        %v624 = vmul.f32 %v592, %v592
        %v625 = vmul.f32 %v593, %v593
        %v626 = vmul.f32 %v594, %v594
        %v627 = vmul.f32 %v595, %v595
        %v628 = vmul.f32 %v596, %v596
        %v629 = vmul.f32 %v597, %v597
        %v630 = vmul.f32 %v598, %v598
        %v631 = vmul.f32 %v599, %v599
        %v632 = vmul.f32 %v600, %v600
        %v633 = vmul.f32 %v601, %v601
        %v634 = vmul.f32 %v602, %v602
        %v635 = vmul.f32 %v603, %v603
        %v636 = vmul.f32 %v604, %v604
        %v637 = vmul.f32 %v605, %v605
        %v638 = vmul.f32 %v606, %v606
        %v639 = vmul.f32 %v607, %v607
        %v640 = vmul.f32 %v608, %v608
        %v641 = vmul.f32 %v609, %v609
        %v642 = vmul.f32 %v610, %v610
        %v643 = vmul.f32 %v611, %v611
        %v644 = vmul.f32 %v612, %v612
        %v645 = vmul.f32 %v613, %v613
        %v646 = vmul.f32 %v614, %v614
        %v647 = vmul.f32 %v615, %v615
        %v648 = vmul.f32 %v616, %v616
        %v649 = vmul.f32 %v617, %v617
        %v650 = vmul.f32 %v618, %v618
        %v651 = vadd.f32 %v483, %v619
        %v652 = vadd.f32 %v484, %v620
        %v653 = vadd.f32 %v485, %v621
        %v654 = vadd.f32 %v486, %v622
        %v655 = vadd.f32 %v487, %v623
        %v656 = vadd.f32 %v488, %v624
        %v657 = vadd.f32 %v489, %v625
        %v658 = vadd.f32 %v490, %v626
        %v659 = vadd.f32 %v491, %v627
        %v660 = vadd.f32 %v492, %v628
        %v661 = vadd.f32 %v493, %v629
        %v662 = vadd.f32 %v494, %v630
        %v663 = vadd.f32 %v495, %v631
        %v664 = vadd.f32 %v496, %v632
        %v665 = vadd.f32 %v497, %v633
        %v666 = vadd.f32 %v498, %v634
        %v667 = vadd.f32 %v499, %v635
        %v668 = vadd.f32 %v500, %v636
        %v669 = vadd.f32 %v501, %v637
        %v670 = vadd.f32 %v502, %v638
        %v671 = vadd.f32 %v503, %v639
        %v672 = vadd.f32 %v504, %v640
        %v673 = vadd.f32 %v505, %v641
        %v674 = vadd.f32 %v506, %v642
        %v675 = vadd.f32 %v507, %v643
        %v676 = vadd.f32 %v508, %v644
        %v677 = vadd.f32 %v509, %v645
        %v678 = vadd.f32 %v510, %v646
        %v679 = vadd.f32 %v511, %v647
        %v680 = vadd.f32 %v512, %v648
        %v681 = vadd.f32 %v513, %v649
        %v682 = vadd.f32 %v514, %v650
        %683 = vset.pattern.permute.xlu0 3
        %684 = vperm.xlu0 %683, %v145
        %v685 = vpop.permute.xlu0 %684
        %687 = vset.pattern.permute.xlu0 3
        %688 = vperm.xlu0 %687, %v146
        %v689 = vpop.permute.xlu0 %688
        %691 = vset.pattern.permute.xlu0 3
        %692 = vperm.xlu0 %691, %v147
        %v693 = vpop.permute.xlu0 %692
        %695 = vset.pattern.permute.xlu0 3
        %696 = vperm.xlu0 %695, %v148
        %v697 = vpop.permute.xlu0 %696
        %699 = vset.pattern.permute.xlu0 3
        %700 = vperm.xlu0 %699, %v149
        %v701 = vpop.permute.xlu0 %700
        %703 = vset.pattern.permute.xlu0 3
        %704 = vperm.xlu0 %703, %v150
        %v705 = vpop.permute.xlu0 %704
        %707 = vset.pattern.permute.xlu0 3
        %708 = vperm.xlu0 %707, %v151
        %v709 = vpop.permute.xlu0 %708
        %711 = vset.pattern.permute.xlu0 3
        %712 = vperm.xlu0 %711, %v152
        %v713 = vpop.permute.xlu0 %712
        %715 = vset.pattern.permute.xlu0 3
        %716 = vperm.xlu0 %715, %v153
        %v717 = vpop.permute.xlu0 %716
        %719 = vset.pattern.permute.xlu0 3
        %720 = vperm.xlu0 %719, %v154
        %v721 = vpop.permute.xlu0 %720
        %723 = vset.pattern.permute.xlu0 3
        %724 = vperm.xlu0 %723, %v155
        %v725 = vpop.permute.xlu0 %724
        %727 = vset.pattern.permute.xlu0 3
        %728 = vperm.xlu0 %727, %v156
        %v729 = vpop.permute.xlu0 %728
        %731 = vset.pattern.permute.xlu0 3
        %732 = vperm.xlu0 %731, %v157
        %v733 = vpop.permute.xlu0 %732
        %735 = vset.pattern.permute.xlu0 3
        %736 = vperm.xlu0 %735, %v158
        %v737 = vpop.permute.xlu0 %736
        %739 = vset.pattern.permute.xlu0 3
        %740 = vperm.xlu0 %739, %v159
        %v741 = vpop.permute.xlu0 %740
        %743 = vset.pattern.permute.xlu0 3
        %744 = vperm.xlu0 %743, %v160
        %v745 = vpop.permute.xlu0 %744
        %v747 = vlaneseq
        %v748 = vshrl.u32 %v747, 7
        %v749 = vsub.s32 3, %v748
        %v750 = vrot.slane %v161, %v749
        %v751 = vlaneseq
        %v752 = vshrl.u32 %v751, 7
        %v753 = vsub.s32 3, %v752
        %v754 = vrot.slane %v162, %v753
        %v755 = vsub.f32 %v685, %v750
        %v756 = vsub.f32 %v685, %v754
        %v757 = vsub.f32 %v689, %v750
        %v758 = vsub.f32 %v689, %v754
        %v759 = vsub.f32 %v693, %v750
        %v760 = vsub.f32 %v693, %v754
        %v761 = vsub.f32 %v697, %v750
        %v762 = vsub.f32 %v697, %v754
        %v763 = vsub.f32 %v701, %v750
        %v764 = vsub.f32 %v701, %v754
        %v765 = vsub.f32 %v705, %v750
        %v766 = vsub.f32 %v705, %v754
        %v767 = vsub.f32 %v709, %v750
        %v768 = vsub.f32 %v709, %v754
        %v769 = vsub.f32 %v713, %v750
        %v770 = vsub.f32 %v713, %v754
        %v771 = vsub.f32 %v717, %v750
        %v772 = vsub.f32 %v717, %v754
        %v773 = vsub.f32 %v721, %v750
        %v774 = vsub.f32 %v721, %v754
        %v775 = vsub.f32 %v725, %v750
        %v776 = vsub.f32 %v725, %v754
        %v777 = vsub.f32 %v729, %v750
        %v778 = vsub.f32 %v729, %v754
        %v779 = vsub.f32 %v733, %v750
        %v780 = vsub.f32 %v733, %v754
        %v781 = vsub.f32 %v737, %v750
        %v782 = vsub.f32 %v737, %v754
        %v783 = vsub.f32 %v741, %v750
        %v784 = vsub.f32 %v741, %v754
        %v785 = vsub.f32 %v745, %v750
        %v786 = vsub.f32 %v745, %v754
        %v787 = vmul.f32 %v755, %v755
        %v788 = vmul.f32 %v756, %v756
        %v789 = vmul.f32 %v757, %v757
        %v790 = vmul.f32 %v758, %v758
        %v791 = vmul.f32 %v759, %v759
        %v792 = vmul.f32 %v760, %v760
        %v793 = vmul.f32 %v761, %v761
        %v794 = vmul.f32 %v762, %v762
        %v795 = vmul.f32 %v763, %v763
        %v796 = vmul.f32 %v764, %v764
        %v797 = vmul.f32 %v765, %v765
        %v798 = vmul.f32 %v766, %v766
        %v799 = vmul.f32 %v767, %v767
        %v800 = vmul.f32 %v768, %v768
        %v801 = vmul.f32 %v769, %v769
        %v802 = vmul.f32 %v770, %v770
        %v803 = vmul.f32 %v771, %v771
        %v804 = vmul.f32 %v772, %v772
        %v805 = vmul.f32 %v773, %v773
        %v806 = vmul.f32 %v774, %v774
        %v807 = vmul.f32 %v775, %v775
        %v808 = vmul.f32 %v776, %v776
        %v809 = vmul.f32 %v777, %v777
        %v810 = vmul.f32 %v778, %v778
        %v811 = vmul.f32 %v779, %v779
        %v812 = vmul.f32 %v780, %v780
        %v813 = vmul.f32 %v781, %v781
        %v814 = vmul.f32 %v782, %v782
        %v815 = vmul.f32 %v783, %v783
        %v816 = vmul.f32 %v784, %v784
        %v817 = vmul.f32 %v785, %v785
        %v818 = vmul.f32 %v786, %v786
        %v819 = vadd.f32 %v651, %v787
        %v820 = vadd.f32 %v652, %v788
        %v821 = vadd.f32 %v653, %v789
        %v822 = vadd.f32 %v654, %v790
        %v823 = vadd.f32 %v655, %v791
        %v824 = vadd.f32 %v656, %v792
        %v825 = vadd.f32 %v657, %v793
        %v826 = vadd.f32 %v658, %v794
        %v827 = vadd.f32 %v659, %v795
        %v828 = vadd.f32 %v660, %v796
        %v829 = vadd.f32 %v661, %v797
        %v830 = vadd.f32 %v662, %v798
        %v831 = vadd.f32 %v663, %v799
        %v832 = vadd.f32 %v664, %v800
        %v833 = vadd.f32 %v665, %v801
        %v834 = vadd.f32 %v666, %v802
        %v835 = vadd.f32 %v667, %v803
        %v836 = vadd.f32 %v668, %v804
        %v837 = vadd.f32 %v669, %v805
        %v838 = vadd.f32 %v670, %v806
        %v839 = vadd.f32 %v671, %v807
        %v840 = vadd.f32 %v672, %v808
        %v841 = vadd.f32 %v673, %v809
        %v842 = vadd.f32 %v674, %v810
        %v843 = vadd.f32 %v675, %v811
        %v844 = vadd.f32 %v676, %v812
        %v845 = vadd.f32 %v677, %v813
        %v846 = vadd.f32 %v678, %v814
        %v847 = vadd.f32 %v679, %v815
        %v848 = vadd.f32 %v680, %v816
        %v849 = vadd.f32 %v681, %v817
        %v850 = vadd.f32 %v682, %v818
        %851 = vset.pattern.permute.xlu0 4
        %852 = vperm.xlu0 %851, %v145
        %v853 = vpop.permute.xlu0 %852
        %855 = vset.pattern.permute.xlu0 4
        %856 = vperm.xlu0 %855, %v146
        %v857 = vpop.permute.xlu0 %856
        %859 = vset.pattern.permute.xlu0 4
        %860 = vperm.xlu0 %859, %v147
        %v861 = vpop.permute.xlu0 %860
        %863 = vset.pattern.permute.xlu0 4
        %864 = vperm.xlu0 %863, %v148
        %v865 = vpop.permute.xlu0 %864
        %867 = vset.pattern.permute.xlu0 4
        %868 = vperm.xlu0 %867, %v149
        %v869 = vpop.permute.xlu0 %868
        %871 = vset.pattern.permute.xlu0 4
        %872 = vperm.xlu0 %871, %v150
        %v873 = vpop.permute.xlu0 %872
        %875 = vset.pattern.permute.xlu0 4
        %876 = vperm.xlu0 %875, %v151
        %v877 = vpop.permute.xlu0 %876
        %879 = vset.pattern.permute.xlu0 4
        %880 = vperm.xlu0 %879, %v152
        %v881 = vpop.permute.xlu0 %880
        %883 = vset.pattern.permute.xlu0 4
        %884 = vperm.xlu0 %883, %v153
        %v885 = vpop.permute.xlu0 %884
        %887 = vset.pattern.permute.xlu0 4
        %888 = vperm.xlu0 %887, %v154
        %v889 = vpop.permute.xlu0 %888
        %891 = vset.pattern.permute.xlu0 4
        %892 = vperm.xlu0 %891, %v155
        %v893 = vpop.permute.xlu0 %892
        %895 = vset.pattern.permute.xlu0 4
        %896 = vperm.xlu0 %895, %v156
        %v897 = vpop.permute.xlu0 %896
        %899 = vset.pattern.permute.xlu0 4
        %900 = vperm.xlu0 %899, %v157
        %v901 = vpop.permute.xlu0 %900
        %903 = vset.pattern.permute.xlu0 4
        %904 = vperm.xlu0 %903, %v158
        %v905 = vpop.permute.xlu0 %904
        %907 = vset.pattern.permute.xlu0 4
        %908 = vperm.xlu0 %907, %v159
        %v909 = vpop.permute.xlu0 %908
        %911 = vset.pattern.permute.xlu0 4
        %912 = vperm.xlu0 %911, %v160
        %v913 = vpop.permute.xlu0 %912
        %v915 = vlaneseq
        %v916 = vshrl.u32 %v915, 7
        %v917 = vsub.s32 4, %v916
        %v918 = vrot.slane %v161, %v917
        %v919 = vlaneseq
        %v920 = vshrl.u32 %v919, 7
        %v921 = vsub.s32 4, %v920
        %v922 = vrot.slane %v162, %v921
        %v923 = vsub.f32 %v853, %v918
        %v924 = vsub.f32 %v853, %v922
        %v925 = vsub.f32 %v857, %v918
        %v926 = vsub.f32 %v857, %v922
        %v927 = vsub.f32 %v861, %v918
        %v928 = vsub.f32 %v861, %v922
        %v929 = vsub.f32 %v865, %v918
        %v930 = vsub.f32 %v865, %v922
        %v931 = vsub.f32 %v869, %v918
        %v932 = vsub.f32 %v869, %v922
        %v933 = vsub.f32 %v873, %v918
        %v934 = vsub.f32 %v873, %v922
        %v935 = vsub.f32 %v877, %v918
        %v936 = vsub.f32 %v877, %v922
        %v937 = vsub.f32 %v881, %v918
        %v938 = vsub.f32 %v881, %v922
        %v939 = vsub.f32 %v885, %v918
        %v940 = vsub.f32 %v885, %v922
        %v941 = vsub.f32 %v889, %v918
        %v942 = vsub.f32 %v889, %v922
        %v943 = vsub.f32 %v893, %v918
        %v944 = vsub.f32 %v893, %v922
        %v945 = vsub.f32 %v897, %v918
        %v946 = vsub.f32 %v897, %v922
        %v947 = vsub.f32 %v901, %v918
        %v948 = vsub.f32 %v901, %v922
        %v949 = vsub.f32 %v905, %v918
        %v950 = vsub.f32 %v905, %v922
        %v951 = vsub.f32 %v909, %v918
        %v952 = vsub.f32 %v909, %v922
        %v953 = vsub.f32 %v913, %v918
        %v954 = vsub.f32 %v913, %v922
        %v955 = vmul.f32 %v923, %v923
        %v956 = vmul.f32 %v924, %v924
        %v957 = vmul.f32 %v925, %v925
        %v958 = vmul.f32 %v926, %v926
        %v959 = vmul.f32 %v927, %v927
        %v960 = vmul.f32 %v928, %v928
        %v961 = vmul.f32 %v929, %v929
        %v962 = vmul.f32 %v930, %v930
        %v963 = vmul.f32 %v931, %v931
        %v964 = vmul.f32 %v932, %v932
        %v965 = vmul.f32 %v933, %v933
        %v966 = vmul.f32 %v934, %v934
        %v967 = vmul.f32 %v935, %v935
        %v968 = vmul.f32 %v936, %v936
        %v969 = vmul.f32 %v937, %v937
        %v970 = vmul.f32 %v938, %v938
        %v971 = vmul.f32 %v939, %v939
        %v972 = vmul.f32 %v940, %v940
        %v973 = vmul.f32 %v941, %v941
        %v974 = vmul.f32 %v942, %v942
        %v975 = vmul.f32 %v943, %v943
        %v976 = vmul.f32 %v944, %v944
        %v977 = vmul.f32 %v945, %v945
        %v978 = vmul.f32 %v946, %v946
        %v979 = vmul.f32 %v947, %v947
        %v980 = vmul.f32 %v948, %v948
        %v981 = vmul.f32 %v949, %v949
        %v982 = vmul.f32 %v950, %v950
        %v983 = vmul.f32 %v951, %v951
        %v984 = vmul.f32 %v952, %v952
        %v985 = vmul.f32 %v953, %v953
        %v986 = vmul.f32 %v954, %v954
        %v987 = vadd.f32 %v819, %v955
        %v988 = vadd.f32 %v820, %v956
        %v989 = vadd.f32 %v821, %v957
        %v990 = vadd.f32 %v822, %v958
        %v991 = vadd.f32 %v823, %v959
        %v992 = vadd.f32 %v824, %v960
        %v993 = vadd.f32 %v825, %v961
        %v994 = vadd.f32 %v826, %v962
        %v995 = vadd.f32 %v827, %v963
        %v996 = vadd.f32 %v828, %v964
        %v997 = vadd.f32 %v829, %v965
        %v998 = vadd.f32 %v830, %v966
        %v999 = vadd.f32 %v831, %v967
        %v1000 = vadd.f32 %v832, %v968
        %v1001 = vadd.f32 %v833, %v969
        %v1002 = vadd.f32 %v834, %v970
        %v1003 = vadd.f32 %v835, %v971
        %v1004 = vadd.f32 %v836, %v972
        %v1005 = vadd.f32 %v837, %v973
        %v1006 = vadd.f32 %v838, %v974
        %v1007 = vadd.f32 %v839, %v975
        %v1008 = vadd.f32 %v840, %v976
        %v1009 = vadd.f32 %v841, %v977
        %v1010 = vadd.f32 %v842, %v978
        %v1011 = vadd.f32 %v843, %v979
        %v1012 = vadd.f32 %v844, %v980
        %v1013 = vadd.f32 %v845, %v981
        %v1014 = vadd.f32 %v846, %v982
        %v1015 = vadd.f32 %v847, %v983
        %v1016 = vadd.f32 %v848, %v984
        %v1017 = vadd.f32 %v849, %v985
        %v1018 = vadd.f32 %v850, %v986
        %1019 = vset.pattern.permute.xlu0 5
        %1020 = vperm.xlu0 %1019, %v145
        %v1021 = vpop.permute.xlu0 %1020
        %1023 = vset.pattern.permute.xlu0 5
        %1024 = vperm.xlu0 %1023, %v146
        %v1025 = vpop.permute.xlu0 %1024
        %1027 = vset.pattern.permute.xlu0 5
        %1028 = vperm.xlu0 %1027, %v147
        %v1029 = vpop.permute.xlu0 %1028
        %1031 = vset.pattern.permute.xlu0 5
        %1032 = vperm.xlu0 %1031, %v148
        %v1033 = vpop.permute.xlu0 %1032
        %1035 = vset.pattern.permute.xlu0 5
        %1036 = vperm.xlu0 %1035, %v149
        %v1037 = vpop.permute.xlu0 %1036
        %1039 = vset.pattern.permute.xlu0 5
        %1040 = vperm.xlu0 %1039, %v150
        %v1041 = vpop.permute.xlu0 %1040
        %1043 = vset.pattern.permute.xlu0 5
        %1044 = vperm.xlu0 %1043, %v151
        %v1045 = vpop.permute.xlu0 %1044
        %1047 = vset.pattern.permute.xlu0 5
        %1048 = vperm.xlu0 %1047, %v152
        %v1049 = vpop.permute.xlu0 %1048
        %1051 = vset.pattern.permute.xlu0 5
        %1052 = vperm.xlu0 %1051, %v153
        %v1053 = vpop.permute.xlu0 %1052
        %1055 = vset.pattern.permute.xlu0 5
        %1056 = vperm.xlu0 %1055, %v154
        %v1057 = vpop.permute.xlu0 %1056
        %1059 = vset.pattern.permute.xlu0 5
        %1060 = vperm.xlu0 %1059, %v155
        %v1061 = vpop.permute.xlu0 %1060
        %1063 = vset.pattern.permute.xlu0 5
        %1064 = vperm.xlu0 %1063, %v156
        %v1065 = vpop.permute.xlu0 %1064
        %1067 = vset.pattern.permute.xlu0 5
        %1068 = vperm.xlu0 %1067, %v157
        %v1069 = vpop.permute.xlu0 %1068
        %1071 = vset.pattern.permute.xlu0 5
        %1072 = vperm.xlu0 %1071, %v158
        %v1073 = vpop.permute.xlu0 %1072
        %1075 = vset.pattern.permute.xlu0 5
        %1076 = vperm.xlu0 %1075, %v159
        %v1077 = vpop.permute.xlu0 %1076
        %1079 = vset.pattern.permute.xlu0 5
        %1080 = vperm.xlu0 %1079, %v160
        %v1081 = vpop.permute.xlu0 %1080
        %v1083 = vlaneseq
        %v1084 = vshrl.u32 %v1083, 7
        %v1085 = vsub.s32 5, %v1084
        %v1086 = vrot.slane %v161, %v1085
        %v1087 = vlaneseq
        %v1088 = vshrl.u32 %v1087, 7
        %v1089 = vsub.s32 5, %v1088
        %v1090 = vrot.slane %v162, %v1089
        %v1091 = vsub.f32 %v1021, %v1086
        %v1092 = vsub.f32 %v1021, %v1090
        %v1093 = vsub.f32 %v1025, %v1086
        %v1094 = vsub.f32 %v1025, %v1090
        %v1095 = vsub.f32 %v1029, %v1086
        %v1096 = vsub.f32 %v1029, %v1090
        %v1097 = vsub.f32 %v1033, %v1086
        %v1098 = vsub.f32 %v1033, %v1090
        %v1099 = vsub.f32 %v1037, %v1086
        %v1100 = vsub.f32 %v1037, %v1090
        %v1101 = vsub.f32 %v1041, %v1086
        %v1102 = vsub.f32 %v1041, %v1090
        %v1103 = vsub.f32 %v1045, %v1086
        %v1104 = vsub.f32 %v1045, %v1090
        %v1105 = vsub.f32 %v1049, %v1086
        %v1106 = vsub.f32 %v1049, %v1090
        %v1107 = vsub.f32 %v1053, %v1086
        %v1108 = vsub.f32 %v1053, %v1090
        %v1109 = vsub.f32 %v1057, %v1086
        %v1110 = vsub.f32 %v1057, %v1090
        %v1111 = vsub.f32 %v1061, %v1086
        %v1112 = vsub.f32 %v1061, %v1090
        %v1113 = vsub.f32 %v1065, %v1086
        %v1114 = vsub.f32 %v1065, %v1090
        %v1115 = vsub.f32 %v1069, %v1086
        %v1116 = vsub.f32 %v1069, %v1090
        %v1117 = vsub.f32 %v1073, %v1086
        %v1118 = vsub.f32 %v1073, %v1090
        %v1119 = vsub.f32 %v1077, %v1086
        %v1120 = vsub.f32 %v1077, %v1090
        %v1121 = vsub.f32 %v1081, %v1086
        %v1122 = vsub.f32 %v1081, %v1090
        %v1123 = vmul.f32 %v1091, %v1091
        %v1124 = vmul.f32 %v1092, %v1092
        %v1125 = vmul.f32 %v1093, %v1093
        %v1126 = vmul.f32 %v1094, %v1094
        %v1127 = vmul.f32 %v1095, %v1095
        %v1128 = vmul.f32 %v1096, %v1096
        %v1129 = vmul.f32 %v1097, %v1097
        %v1130 = vmul.f32 %v1098, %v1098
        %v1131 = vmul.f32 %v1099, %v1099
        %v1132 = vmul.f32 %v1100, %v1100
        %v1133 = vmul.f32 %v1101, %v1101
        %v1134 = vmul.f32 %v1102, %v1102
        %v1135 = vmul.f32 %v1103, %v1103
        %v1136 = vmul.f32 %v1104, %v1104
        %v1137 = vmul.f32 %v1105, %v1105
        %v1138 = vmul.f32 %v1106, %v1106
        %v1139 = vmul.f32 %v1107, %v1107
        %v1140 = vmul.f32 %v1108, %v1108
        %v1141 = vmul.f32 %v1109, %v1109
        %v1142 = vmul.f32 %v1110, %v1110
        %v1143 = vmul.f32 %v1111, %v1111
        %v1144 = vmul.f32 %v1112, %v1112
        %v1145 = vmul.f32 %v1113, %v1113
        %v1146 = vmul.f32 %v1114, %v1114
        %v1147 = vmul.f32 %v1115, %v1115
        %v1148 = vmul.f32 %v1116, %v1116
        %v1149 = vmul.f32 %v1117, %v1117
        %v1150 = vmul.f32 %v1118, %v1118
        %v1151 = vmul.f32 %v1119, %v1119
        %v1152 = vmul.f32 %v1120, %v1120
        %v1153 = vmul.f32 %v1121, %v1121
        %v1154 = vmul.f32 %v1122, %v1122
        %v1155 = vadd.f32 %v987, %v1123
        %v1156 = vadd.f32 %v988, %v1124
        %v1157 = vadd.f32 %v989, %v1125
        %v1158 = vadd.f32 %v990, %v1126
        %v1159 = vadd.f32 %v991, %v1127
        %v1160 = vadd.f32 %v992, %v1128
        %v1161 = vadd.f32 %v993, %v1129
        %v1162 = vadd.f32 %v994, %v1130
        %v1163 = vadd.f32 %v995, %v1131
        %v1164 = vadd.f32 %v996, %v1132
        %v1165 = vadd.f32 %v997, %v1133
        %v1166 = vadd.f32 %v998, %v1134
        %v1167 = vadd.f32 %v999, %v1135
        %v1168 = vadd.f32 %v1000, %v1136
        %v1169 = vadd.f32 %v1001, %v1137
        %v1170 = vadd.f32 %v1002, %v1138
        %v1171 = vadd.f32 %v1003, %v1139
        %v1172 = vadd.f32 %v1004, %v1140
        %v1173 = vadd.f32 %v1005, %v1141
        %v1174 = vadd.f32 %v1006, %v1142
        %v1175 = vadd.f32 %v1007, %v1143
        %v1176 = vadd.f32 %v1008, %v1144
        %v1177 = vadd.f32 %v1009, %v1145
        %v1178 = vadd.f32 %v1010, %v1146
        %v1179 = vadd.f32 %v1011, %v1147
        %v1180 = vadd.f32 %v1012, %v1148
        %v1181 = vadd.f32 %v1013, %v1149
        %v1182 = vadd.f32 %v1014, %v1150
        %v1183 = vadd.f32 %v1015, %v1151
        %v1184 = vadd.f32 %v1016, %v1152
        %v1185 = vadd.f32 %v1017, %v1153
        %v1186 = vadd.f32 %v1018, %v1154
        %1187 = vset.pattern.permute.xlu0 6
        %1188 = vperm.xlu0 %1187, %v145
        %v1189 = vpop.permute.xlu0 %1188
        %1191 = vset.pattern.permute.xlu0 6
        %1192 = vperm.xlu0 %1191, %v146
        %v1193 = vpop.permute.xlu0 %1192
        %1195 = vset.pattern.permute.xlu0 6
        %1196 = vperm.xlu0 %1195, %v147
        %v1197 = vpop.permute.xlu0 %1196
        %1199 = vset.pattern.permute.xlu0 6
        %1200 = vperm.xlu0 %1199, %v148
        %v1201 = vpop.permute.xlu0 %1200
        %1203 = vset.pattern.permute.xlu0 6
        %1204 = vperm.xlu0 %1203, %v149
        %v1205 = vpop.permute.xlu0 %1204
        %1207 = vset.pattern.permute.xlu0 6
        %1208 = vperm.xlu0 %1207, %v150
        %v1209 = vpop.permute.xlu0 %1208
        %1211 = vset.pattern.permute.xlu0 6
        %1212 = vperm.xlu0 %1211, %v151
        %v1213 = vpop.permute.xlu0 %1212
        %1215 = vset.pattern.permute.xlu0 6
        %1216 = vperm.xlu0 %1215, %v152
        %v1217 = vpop.permute.xlu0 %1216
        %1219 = vset.pattern.permute.xlu0 6
        %1220 = vperm.xlu0 %1219, %v153
        %v1221 = vpop.permute.xlu0 %1220
        %1223 = vset.pattern.permute.xlu0 6
        %1224 = vperm.xlu0 %1223, %v154
        %v1225 = vpop.permute.xlu0 %1224
        %1227 = vset.pattern.permute.xlu0 6
        %1228 = vperm.xlu0 %1227, %v155
        %v1229 = vpop.permute.xlu0 %1228
        %1231 = vset.pattern.permute.xlu0 6
        %1232 = vperm.xlu0 %1231, %v156
        %v1233 = vpop.permute.xlu0 %1232
        %1235 = vset.pattern.permute.xlu0 6
        %1236 = vperm.xlu0 %1235, %v157
        %v1237 = vpop.permute.xlu0 %1236
        %1239 = vset.pattern.permute.xlu0 6
        %1240 = vperm.xlu0 %1239, %v158
        %v1241 = vpop.permute.xlu0 %1240
        %1243 = vset.pattern.permute.xlu0 6
        %1244 = vperm.xlu0 %1243, %v159
        %v1245 = vpop.permute.xlu0 %1244
        %1247 = vset.pattern.permute.xlu0 6
        %1248 = vperm.xlu0 %1247, %v160
        %v1249 = vpop.permute.xlu0 %1248
        %v1251 = vlaneseq
        %v1252 = vshrl.u32 %v1251, 7
        %v1253 = vsub.s32 6, %v1252
        %v1254 = vrot.slane %v161, %v1253
        %v1255 = vlaneseq
        %v1256 = vshrl.u32 %v1255, 7
        %v1257 = vsub.s32 6, %v1256
        %v1258 = vrot.slane %v162, %v1257
        %v1259 = vsub.f32 %v1189, %v1254
        %v1260 = vsub.f32 %v1189, %v1258
        %v1261 = vsub.f32 %v1193, %v1254
        %v1262 = vsub.f32 %v1193, %v1258
        %v1263 = vsub.f32 %v1197, %v1254
        %v1264 = vsub.f32 %v1197, %v1258
        %v1265 = vsub.f32 %v1201, %v1254
        %v1266 = vsub.f32 %v1201, %v1258
        %v1267 = vsub.f32 %v1205, %v1254
        %v1268 = vsub.f32 %v1205, %v1258
        %v1269 = vsub.f32 %v1209, %v1254
        %v1270 = vsub.f32 %v1209, %v1258
        %v1271 = vsub.f32 %v1213, %v1254
        %v1272 = vsub.f32 %v1213, %v1258
        %v1273 = vsub.f32 %v1217, %v1254
        %v1274 = vsub.f32 %v1217, %v1258
        %v1275 = vsub.f32 %v1221, %v1254
        %v1276 = vsub.f32 %v1221, %v1258
        %v1277 = vsub.f32 %v1225, %v1254
        %v1278 = vsub.f32 %v1225, %v1258
        %v1279 = vsub.f32 %v1229, %v1254
        %v1280 = vsub.f32 %v1229, %v1258
        %v1281 = vsub.f32 %v1233, %v1254
        %v1282 = vsub.f32 %v1233, %v1258
        %v1283 = vsub.f32 %v1237, %v1254
        %v1284 = vsub.f32 %v1237, %v1258
        %v1285 = vsub.f32 %v1241, %v1254
        %v1286 = vsub.f32 %v1241, %v1258
        %v1287 = vsub.f32 %v1245, %v1254
        %v1288 = vsub.f32 %v1245, %v1258
        %v1289 = vsub.f32 %v1249, %v1254
        %v1290 = vsub.f32 %v1249, %v1258
        %v1291 = vmul.f32 %v1259, %v1259
        %v1292 = vmul.f32 %v1260, %v1260
        %v1293 = vmul.f32 %v1261, %v1261
        %v1294 = vmul.f32 %v1262, %v1262
        %v1295 = vmul.f32 %v1263, %v1263
        %v1296 = vmul.f32 %v1264, %v1264
        %v1297 = vmul.f32 %v1265, %v1265
        %v1298 = vmul.f32 %v1266, %v1266
        %v1299 = vmul.f32 %v1267, %v1267
        %v1300 = vmul.f32 %v1268, %v1268
        %v1301 = vmul.f32 %v1269, %v1269
        %v1302 = vmul.f32 %v1270, %v1270
        %v1303 = vmul.f32 %v1271, %v1271
        %v1304 = vmul.f32 %v1272, %v1272
        %v1305 = vmul.f32 %v1273, %v1273
        %v1306 = vmul.f32 %v1274, %v1274
        %v1307 = vmul.f32 %v1275, %v1275
        %v1308 = vmul.f32 %v1276, %v1276
        %v1309 = vmul.f32 %v1277, %v1277
        %v1310 = vmul.f32 %v1278, %v1278
        %v1311 = vmul.f32 %v1279, %v1279
        %v1312 = vmul.f32 %v1280, %v1280
        %v1313 = vmul.f32 %v1281, %v1281
        %v1314 = vmul.f32 %v1282, %v1282
        %v1315 = vmul.f32 %v1283, %v1283
        %v1316 = vmul.f32 %v1284, %v1284
        %v1317 = vmul.f32 %v1285, %v1285
        %v1318 = vmul.f32 %v1286, %v1286
        %v1319 = vmul.f32 %v1287, %v1287
        %v1320 = vmul.f32 %v1288, %v1288
        %v1321 = vmul.f32 %v1289, %v1289
        %v1322 = vmul.f32 %v1290, %v1290
        %v1323 = vadd.f32 %v1155, %v1291
        %v1324 = vadd.f32 %v1156, %v1292
        %v1325 = vadd.f32 %v1157, %v1293
        %v1326 = vadd.f32 %v1158, %v1294
        %v1327 = vadd.f32 %v1159, %v1295
        %v1328 = vadd.f32 %v1160, %v1296
        %v1329 = vadd.f32 %v1161, %v1297
        %v1330 = vadd.f32 %v1162, %v1298
        %v1331 = vadd.f32 %v1163, %v1299
        %v1332 = vadd.f32 %v1164, %v1300
        %v1333 = vadd.f32 %v1165, %v1301
        %v1334 = vadd.f32 %v1166, %v1302
        %v1335 = vadd.f32 %v1167, %v1303
        %v1336 = vadd.f32 %v1168, %v1304
        %v1337 = vadd.f32 %v1169, %v1305
        %v1338 = vadd.f32 %v1170, %v1306
        %v1339 = vadd.f32 %v1171, %v1307
        %v1340 = vadd.f32 %v1172, %v1308
        %v1341 = vadd.f32 %v1173, %v1309
        %v1342 = vadd.f32 %v1174, %v1310
        %v1343 = vadd.f32 %v1175, %v1311
        %v1344 = vadd.f32 %v1176, %v1312
        %v1345 = vadd.f32 %v1177, %v1313
        %v1346 = vadd.f32 %v1178, %v1314
        %v1347 = vadd.f32 %v1179, %v1315
        %v1348 = vadd.f32 %v1180, %v1316
        %v1349 = vadd.f32 %v1181, %v1317
        %v1350 = vadd.f32 %v1182, %v1318
        %v1351 = vadd.f32 %v1183, %v1319
        %v1352 = vadd.f32 %v1184, %v1320
        %v1353 = vadd.f32 %v1185, %v1321
        %v1354 = vadd.f32 %v1186, %v1322
        %1355 = vset.pattern.permute.xlu0 7
        %1356 = vperm.xlu0 %1355, %v145
        %v1357 = vpop.permute.xlu0 %1356
        %1359 = vset.pattern.permute.xlu0 7
        %1360 = vperm.xlu0 %1359, %v146
        %v1361 = vpop.permute.xlu0 %1360
        %1363 = vset.pattern.permute.xlu0 7
        %1364 = vperm.xlu0 %1363, %v147
        %v1365 = vpop.permute.xlu0 %1364
        %1367 = vset.pattern.permute.xlu0 7
        %1368 = vperm.xlu0 %1367, %v148
        %v1369 = vpop.permute.xlu0 %1368
        %1371 = vset.pattern.permute.xlu0 7
        %1372 = vperm.xlu0 %1371, %v149
        %v1373 = vpop.permute.xlu0 %1372
        %1375 = vset.pattern.permute.xlu0 7
        %1376 = vperm.xlu0 %1375, %v150
        %v1377 = vpop.permute.xlu0 %1376
        %1379 = vset.pattern.permute.xlu0 7
        %1380 = vperm.xlu0 %1379, %v151
        %v1381 = vpop.permute.xlu0 %1380
        %1383 = vset.pattern.permute.xlu0 7
        %1384 = vperm.xlu0 %1383, %v152
        %v1385 = vpop.permute.xlu0 %1384
        %1387 = vset.pattern.permute.xlu0 7
        %1388 = vperm.xlu0 %1387, %v153
        %v1389 = vpop.permute.xlu0 %1388
        %1391 = vset.pattern.permute.xlu0 7
        %1392 = vperm.xlu0 %1391, %v154
        %v1393 = vpop.permute.xlu0 %1392
        %1395 = vset.pattern.permute.xlu0 7
        %1396 = vperm.xlu0 %1395, %v155
        %v1397 = vpop.permute.xlu0 %1396
        %1399 = vset.pattern.permute.xlu0 7
        %1400 = vperm.xlu0 %1399, %v156
        %v1401 = vpop.permute.xlu0 %1400
        %1403 = vset.pattern.permute.xlu0 7
        %1404 = vperm.xlu0 %1403, %v157
        %v1405 = vpop.permute.xlu0 %1404
        %1407 = vset.pattern.permute.xlu0 7
        %1408 = vperm.xlu0 %1407, %v158
        %v1409 = vpop.permute.xlu0 %1408
        %1411 = vset.pattern.permute.xlu0 7
        %1412 = vperm.xlu0 %1411, %v159
        %v1413 = vpop.permute.xlu0 %1412
        %1415 = vset.pattern.permute.xlu0 7
        %1416 = vperm.xlu0 %1415, %v160
        %v1417 = vpop.permute.xlu0 %1416
        %v1419 = vlaneseq
        %v1420 = vshrl.u32 %v1419, 7
        %v1421 = vsub.s32 7, %v1420
        %v1422 = vrot.slane %v161, %v1421
        %v1423 = vlaneseq
        %v1424 = vshrl.u32 %v1423, 7
        %v1425 = vsub.s32 7, %v1424
        %v1426 = vrot.slane %v162, %v1425
        %v1427 = vsub.f32 %v1357, %v1422
        %v1428 = vsub.f32 %v1357, %v1426
        %v1429 = vsub.f32 %v1361, %v1422
        %v1430 = vsub.f32 %v1361, %v1426
        %v1431 = vsub.f32 %v1365, %v1422
        %v1432 = vsub.f32 %v1365, %v1426
        %v1433 = vsub.f32 %v1369, %v1422
        %v1434 = vsub.f32 %v1369, %v1426
        %v1435 = vsub.f32 %v1373, %v1422
        %v1436 = vsub.f32 %v1373, %v1426
        %v1437 = vsub.f32 %v1377, %v1422
        %v1438 = vsub.f32 %v1377, %v1426
        %v1439 = vsub.f32 %v1381, %v1422
        %v1440 = vsub.f32 %v1381, %v1426
        %v1441 = vsub.f32 %v1385, %v1422
        %v1442 = vsub.f32 %v1385, %v1426
        %v1443 = vsub.f32 %v1389, %v1422
        %v1444 = vsub.f32 %v1389, %v1426
        %v1445 = vsub.f32 %v1393, %v1422
        %v1446 = vsub.f32 %v1393, %v1426
        %v1447 = vsub.f32 %v1397, %v1422
        %v1448 = vsub.f32 %v1397, %v1426
        %v1449 = vsub.f32 %v1401, %v1422
        %v1450 = vsub.f32 %v1401, %v1426
        %v1451 = vsub.f32 %v1405, %v1422
        %v1452 = vsub.f32 %v1405, %v1426
        %v1453 = vsub.f32 %v1409, %v1422
        %v1454 = vsub.f32 %v1409, %v1426
        %v1455 = vsub.f32 %v1413, %v1422
        %v1456 = vsub.f32 %v1413, %v1426
        %v1457 = vsub.f32 %v1417, %v1422
        %v1458 = vsub.f32 %v1417, %v1426
        %v1459 = vmul.f32 %v1427, %v1427
        %v1460 = vmul.f32 %v1428, %v1428
        %v1461 = vmul.f32 %v1429, %v1429
        %v1462 = vmul.f32 %v1430, %v1430
        %v1463 = vmul.f32 %v1431, %v1431
        %v1464 = vmul.f32 %v1432, %v1432
        %v1465 = vmul.f32 %v1433, %v1433
        %v1466 = vmul.f32 %v1434, %v1434
        %v1467 = vmul.f32 %v1435, %v1435
        %v1468 = vmul.f32 %v1436, %v1436
        %v1469 = vmul.f32 %v1437, %v1437
        %v1470 = vmul.f32 %v1438, %v1438
        %v1471 = vmul.f32 %v1439, %v1439
        %v1472 = vmul.f32 %v1440, %v1440
        %v1473 = vmul.f32 %v1441, %v1441
        %v1474 = vmul.f32 %v1442, %v1442
        %v1475 = vmul.f32 %v1443, %v1443
        %v1476 = vmul.f32 %v1444, %v1444
        %v1477 = vmul.f32 %v1445, %v1445
        %v1478 = vmul.f32 %v1446, %v1446
        %v1479 = vmul.f32 %v1447, %v1447
        %v1480 = vmul.f32 %v1448, %v1448
        %v1481 = vmul.f32 %v1449, %v1449
        %v1482 = vmul.f32 %v1450, %v1450
        %v1483 = vmul.f32 %v1451, %v1451
        %v1484 = vmul.f32 %v1452, %v1452
        %v1485 = vmul.f32 %v1453, %v1453
        %v1486 = vmul.f32 %v1454, %v1454
        %v1487 = vmul.f32 %v1455, %v1455
        %v1488 = vmul.f32 %v1456, %v1456
        %v1489 = vmul.f32 %v1457, %v1457
        %v1490 = vmul.f32 %v1458, %v1458
        %v1491 = vadd.f32 %v1323, %v1459
        %v1492 = vadd.f32 %v1324, %v1460
        %v1493 = vadd.f32 %v1325, %v1461
        %v1494 = vadd.f32 %v1326, %v1462
        %v1495 = vadd.f32 %v1327, %v1463
        %v1496 = vadd.f32 %v1328, %v1464
        %v1497 = vadd.f32 %v1329, %v1465
        %v1498 = vadd.f32 %v1330, %v1466
        %v1499 = vadd.f32 %v1331, %v1467
        %v1500 = vadd.f32 %v1332, %v1468
        %v1501 = vadd.f32 %v1333, %v1469
        %v1502 = vadd.f32 %v1334, %v1470
        %v1503 = vadd.f32 %v1335, %v1471
        %v1504 = vadd.f32 %v1336, %v1472
        %v1505 = vadd.f32 %v1337, %v1473
        %v1506 = vadd.f32 %v1338, %v1474
        %v1507 = vadd.f32 %v1339, %v1475
        %v1508 = vadd.f32 %v1340, %v1476
        %v1509 = vadd.f32 %v1341, %v1477
        %v1510 = vadd.f32 %v1342, %v1478
        %v1511 = vadd.f32 %v1343, %v1479
        %v1512 = vadd.f32 %v1344, %v1480
        %v1513 = vadd.f32 %v1345, %v1481
        %v1514 = vadd.f32 %v1346, %v1482
        %v1515 = vadd.f32 %v1347, %v1483
        %v1516 = vadd.f32 %v1348, %v1484
        %v1517 = vadd.f32 %v1349, %v1485
        %v1518 = vadd.f32 %v1350, %v1486
        %v1519 = vadd.f32 %v1351, %v1487
        %v1520 = vadd.f32 %v1352, %v1488
        %v1521 = vadd.f32 %v1353, %v1489
        %v1522 = vadd.f32 %v1354, %v1490
        %s1523 = smul.u32 %s16, 128
        %v1524 = vlaneseq
        %v1525 = vshrl.u32 %v1524, 7
        %v1526 = vadd.s32 %v1525, 8
        %v1527 = vadd.s32 %v1525, 16
        %v1528 = vadd.s32 %v1525, 24
        %v1529 = vadd.s32 %v1525, 32
        %v1530 = vadd.s32 %v1525, 40
        %v1531 = vadd.s32 %v1525, 48
        %v1532 = vadd.s32 %v1525, 56
        %v1533 = vadd.s32 %v1525, 64
        %v1534 = vadd.s32 %v1525, 72
        %v1535 = vadd.s32 %v1525, 80
        %v1536 = vadd.s32 %v1525, 88
        %v1537 = vadd.s32 %v1525, 96
        %v1538 = vadd.s32 %v1525, 104
        %v1539 = vadd.s32 %v1525, 112
        %v1540 = vadd.s32 %v1525, 120
        %v1541 = vstv %s1523
        %v1542 = vadd.s32 %v1541, %v1525
        %v1543 = vadd.s32 %v1541, %v1526
        %v1544 = vadd.s32 %v1541, %v1527
        %v1545 = vadd.s32 %v1541, %v1528
        %v1546 = vadd.s32 %v1541, %v1529
        %v1547 = vadd.s32 %v1541, %v1530
        %v1548 = vadd.s32 %v1541, %v1531
        %v1549 = vadd.s32 %v1541, %v1532
        %v1550 = vadd.s32 %v1541, %v1533
        %v1551 = vadd.s32 %v1541, %v1534
        %v1552 = vadd.s32 %v1541, %v1535
        %v1553 = vadd.s32 %v1541, %v1536
        %v1554 = vadd.s32 %v1541, %v1537
        %v1555 = vadd.s32 %v1541, %v1538
        %v1556 = vadd.s32 %v1541, %v1539
        %v1557 = vadd.s32 %v1541, %v1540
        %v1558 = vlaneseq
        %v1559 = vand.u32 %v1558, 127
        %v1560 = vadd.s32 %v1559, 128
        %vm1561 = vcmp.eq.s32.totalorder %v1542, %v1559
        %vm1562 = vcmp.eq.s32.totalorder %v1542, %v1560
        %vm1563 = vcmp.eq.s32.totalorder %v1543, %v1559
        %vm1564 = vcmp.eq.s32.totalorder %v1543, %v1560
        %vm1565 = vcmp.eq.s32.totalorder %v1544, %v1559
        %vm1566 = vcmp.eq.s32.totalorder %v1544, %v1560
        %vm1567 = vcmp.eq.s32.totalorder %v1545, %v1559
        %vm1568 = vcmp.eq.s32.totalorder %v1545, %v1560
        %vm1569 = vcmp.eq.s32.totalorder %v1546, %v1559
        %vm1570 = vcmp.eq.s32.totalorder %v1546, %v1560
        %vm1571 = vcmp.eq.s32.totalorder %v1547, %v1559
        %vm1572 = vcmp.eq.s32.totalorder %v1547, %v1560
        %vm1573 = vcmp.eq.s32.totalorder %v1548, %v1559
        %vm1574 = vcmp.eq.s32.totalorder %v1548, %v1560
        %vm1575 = vcmp.eq.s32.totalorder %v1549, %v1559
        %vm1576 = vcmp.eq.s32.totalorder %v1549, %v1560
        %vm1577 = vcmp.eq.s32.totalorder %v1550, %v1559
        %vm1578 = vcmp.eq.s32.totalorder %v1550, %v1560
        %vm1579 = vcmp.eq.s32.totalorder %v1551, %v1559
        %vm1580 = vcmp.eq.s32.totalorder %v1551, %v1560
        %vm1581 = vcmp.eq.s32.totalorder %v1552, %v1559
        %vm1582 = vcmp.eq.s32.totalorder %v1552, %v1560
        %vm1583 = vcmp.eq.s32.totalorder %v1553, %v1559
        %vm1584 = vcmp.eq.s32.totalorder %v1553, %v1560
        %vm1585 = vcmp.eq.s32.totalorder %v1554, %v1559
        %vm1586 = vcmp.eq.s32.totalorder %v1554, %v1560
        %vm1587 = vcmp.eq.s32.totalorder %v1555, %v1559
        %vm1588 = vcmp.eq.s32.totalorder %v1555, %v1560
        %vm1589 = vcmp.eq.s32.totalorder %v1556, %v1559
        %vm1590 = vcmp.eq.s32.totalorder %v1556, %v1560
        %vm1591 = vcmp.eq.s32.totalorder %v1557, %v1559
        %vm1592 = vcmp.eq.s32.totalorder %v1557, %v1560
        %v1593 = vsel %vm1561, 1e+30, %v1491
        %v1594 = vsel %vm1562, 1e+30, %v1492
        %v1595 = vsel %vm1563, 1e+30, %v1493
        %v1596 = vsel %vm1564, 1e+30, %v1494
        %v1597 = vsel %vm1565, 1e+30, %v1495
        %v1598 = vsel %vm1566, 1e+30, %v1496
        %v1599 = vsel %vm1567, 1e+30, %v1497
        %v1600 = vsel %vm1568, 1e+30, %v1498
        %v1601 = vsel %vm1569, 1e+30, %v1499
        %v1602 = vsel %vm1570, 1e+30, %v1500
        %v1603 = vsel %vm1571, 1e+30, %v1501
        %v1604 = vsel %vm1572, 1e+30, %v1502
        %v1605 = vsel %vm1573, 1e+30, %v1503
        %v1606 = vsel %vm1574, 1e+30, %v1504
        %v1607 = vsel %vm1575, 1e+30, %v1505
        %v1608 = vsel %vm1576, 1e+30, %v1506
        %v1609 = vsel %vm1577, 1e+30, %v1507
        %v1610 = vsel %vm1578, 1e+30, %v1508
        %v1611 = vsel %vm1579, 1e+30, %v1509
        %v1612 = vsel %vm1580, 1e+30, %v1510
        %v1613 = vsel %vm1581, 1e+30, %v1511
        %v1614 = vsel %vm1582, 1e+30, %v1512
        %v1615 = vsel %vm1583, 1e+30, %v1513
        %v1616 = vsel %vm1584, 1e+30, %v1514
        %v1617 = vsel %vm1585, 1e+30, %v1515
        %v1618 = vsel %vm1586, 1e+30, %v1516
        %v1619 = vsel %vm1587, 1e+30, %v1517
        %v1620 = vsel %vm1588, 1e+30, %v1518
        %v1621 = vsel %vm1589, 1e+30, %v1519
        %v1622 = vsel %vm1590, 1e+30, %v1520
        %v1623 = vsel %vm1591, 1e+30, %v1521
        %v1624 = vsel %vm1592, 1e+30, %v1522
        %1625 = vst [vmem:[%s137] sm:$0xff] %v1593
        %1626 = vst [vmem:[%s137 + $0x8] sm:$0xff] %v1594
        %1627 = vst [vmem:[%s137 + $0x10] sm:$0xff] %v1595
        %1628 = vst [vmem:[%s137 + $0x18] sm:$0xff] %v1596
        %1629 = vst [vmem:[%s137 + $0x20] sm:$0xff] %v1597
        %1630 = vst [vmem:[%s137 + $0x28] sm:$0xff] %v1598
        %1631 = vst [vmem:[%s137 + $0x30] sm:$0xff] %v1599
        %1632 = vst [vmem:[%s137 + $0x38] sm:$0xff] %v1600
        %1633 = vst [vmem:[%s137 + $0x40] sm:$0xff] %v1601
        %1634 = vst [vmem:[%s137 + $0x48] sm:$0xff] %v1602
        %1635 = vst [vmem:[%s137 + $0x50] sm:$0xff] %v1603
        %1636 = vst [vmem:[%s137 + $0x58] sm:$0xff] %v1604
        %1637 = vst [vmem:[%s137 + $0x60] sm:$0xff] %v1605
        %1638 = vst [vmem:[%s137 + $0x68] sm:$0xff] %v1606
        %1639 = vst [vmem:[%s137 + $0x70] sm:$0xff] %v1607
        %1640 = vst [vmem:[%s137 + $0x78] sm:$0xff] %v1608
        %1641 = vst [vmem:[%s137 + $0x80] sm:$0xff] %v1609
        %1642 = vst [vmem:[%s137 + $0x88] sm:$0xff] %v1610
        %1643 = vst [vmem:[%s137 + $0x90] sm:$0xff] %v1611
        %1644 = vst [vmem:[%s137 + $0x98] sm:$0xff] %v1612
        %1645 = vst [vmem:[%s137 + $0xa0] sm:$0xff] %v1613
        %1646 = vst [vmem:[%s137 + $0xa8] sm:$0xff] %v1614
        %1647 = vst [vmem:[%s137 + $0xb0] sm:$0xff] %v1615
        %1648 = vst [vmem:[%s137 + $0xb8] sm:$0xff] %v1616
        %1649 = vst [vmem:[%s137 + $0xc0] sm:$0xff] %v1617
        %1650 = vst [vmem:[%s137 + $0xc8] sm:$0xff] %v1618
        %1651 = vst [vmem:[%s137 + $0xd0] sm:$0xff] %v1619
        %1652 = vst [vmem:[%s137 + $0xd8] sm:$0xff] %v1620
        %1653 = vst [vmem:[%s137 + $0xe0] sm:$0xff] %v1621
        %1654 = vst [vmem:[%s137 + $0xe8] sm:$0xff] %v1622
        %1655 = vst [vmem:[%s137 + $0xf0] sm:$0xff] %v1623
        %1656 = vst [vmem:[%s137 + $0xf8] sm:$0xff] %v1624
        %s1657 = sand.u32 %s71, 1
        %s1658 = scalar_lea.sflag [#allocation3], %s1657
        %s1659 = sand.u32 %s71, 1
        %s1660 = smul.addr %s1659, 256
        %s1661 = scalar_lea.vmem [#allocation2], %s1660
        // Predicated region
        $region29: #{tpu_custom_call.1} parent=27 // pred_check
          %p1662 = pneg %p81
        $region30: #{tpu_custom_call.1} parent=27 // pred_check_branch
          %1664 = sbr.rel (%p1662) target = $region32
        $region31: #{tpu_custom_call.1} parent=27 // pred_region
          %s1665 = smul.u32 16, %s16
          %s1667 = ssub.s32 4096, 4096
          %1668 = vsyncadd %s1658, %s1667
          %s1669 = smul.addr %s1665, 2
          %s1670 = smul.addr %s1669, 128
          %s1671 = scalar_lea.hbm %s2, %s1670
          %s1672 = sshll.u32 %s1661, 4
          %s1673 = int_to_ptr.vmem [resolvable:$true] %s1672
          %1678 = dma.vmem_to_hbm [thread:$0]  %s1673, 4096, %s1671, %s1658, 256, 256, 16
        $region32: #{tpu_custom_call.1} parent=27 // pred_fallthru
          _
      $region28: #{tpu_custom_call.1} parent=5 // pred_fallthru
        _
      %p1679 = scmp.le.s32.totalorder 2, %s11
      // Predicated region
      $region33: #{tpu_custom_call.1} parent=5 // pred_check
        %p1680 = pneg %p1679
      $region34: #{tpu_custom_call.1} parent=5 // pred_check_branch
        %1682 = sbr.rel (%p1680) target = $region36
      $region35: #{tpu_custom_call.1} parent=5 // pred_region
        %s1683 = ssub.s32 %s11, 2
        // Predicated region
        $region37: #{tpu_custom_call.1} parent=35 // pred_check
          %p1684 = pneg %p87
        $region38: #{tpu_custom_call.1} parent=35 // pred_check_branch
          %1686 = sbr.rel (%p1684) target = $region40
        $region39: #{tpu_custom_call.1} parent=35 // pred_region
          %s1687 = sand.u32 %s72, 1
          %s1688 = scalar_lea.sflag [#allocation3], %s1687
          %s1689 = sand.u32 %s72, 1
          %s1690 = smul.addr %s1689, 256
          %s1691 = scalar_lea.vmem [#allocation2], %s1690
          %1692 = dma.done %s1688, 4096
        $region40: #{tpu_custom_call.1} parent=35 // pred_fallthru
          _
      $region36: #{tpu_custom_call.1} parent=5 // pred_fallthru
        _
    $region6: #{tpu_custom_call.1} parent=1 // loop_footer
      %s15 = sadd.s32 1, %s11
    $region7: #{tpu_custom_call.1} parent=1 // loop_footer_branch
      %10 = sbr.rel target = $region3
    $region8: #{tpu_custom_call.1} parent=1 // loop_exit
      _
    %1693 = vsyncpa [#allocation3], 1
    %s1694 = scalar_lea.sflag [#allocation3], 1
    %1695 = vsyncpa %s1694, 1

</llo_original>
